<compile_context>
chip_gen: v6e
topology: v6e:2x2x1
jax: 0.10.0
libtpu: 0.0.40
codegen_flags: <defaults>
</compile_context>

<pallas_src>
import functools

import jax
import jax.numpy as jnp
from jax import lax
from jax.experimental import pallas as pl
from jax.experimental.pallas import tpu as pltpu


def _round_up(x, m):
    return (x + m - 1) // m * m


# -----------------------------------------------------------------------------
# Kernel: per-image fused conv (8 tap-pair matmuls) + BN shift + LeakyReLU(0.2)
# -----------------------------------------------------------------------------
def _make_kernel(Ho, Wo, Cin, kh=4):
    def kernel(xr_ref, w_ref, shift_ref, o_ref, lhs_ref, acc_ref):
        # xr_ref:    (1, H+2, Wo+1, 2*Cin)  bf16  padded NHWC input, W-parity folded
        # w_ref:     (2*kh, 2*Cin, Coutp)   bf16  BN-scale-folded conv weights
        # shift_ref: (1, Coutp)             f32   BN shift (beta - mean*scale)
        # o_ref:     (1, Ho*Wo, Coutp)      f32
        # lhs_ref:   (Ho*Wo, 2*Cin)         f32   VMEM scratch (per-piece LHS slab)
        # acc_ref:   (Ho*Wo, Coutp)         f32   VMEM accumulator
        acc_ref[...] = jnp.zeros_like(acc_ref)
        for dh in range(kh):            # kernel-height tap
            for p in range(2):          # kernel-width tap pair (dw in {2p, 2p+1})
                # Gather the LHS slab for this tap pair: aligned full-lane stores,
                # row offsets are multiples of Wo (static), done entirely in VMEM.
                for i in range(Ho):
                    lhs_ref[i * Wo:(i + 1) * Wo, :] = (
                        xr_ref[0, 2 * i + dh, p:p + Wo, :].astype(jnp.float32))
                acc_ref[...] += jnp.dot(
                    lhs_ref[...].astype(jnp.bfloat16),   # exact (data was bf16)
                    w_ref[2 * dh + p],
                    preferred_element_type=jnp.float32)
        y = acc_ref[...] + shift_ref[...]
        y = jnp.where(y > 0, y, 0.2 * y)                 # LeakyReLU(0.2)
        o_ref[0] = y.astype(o_ref.dtype)

    return kernel


# -----------------------------------------------------------------------------
# Wrapper: NCHW -> (fused kernel) -> NCHW
# -----------------------------------------------------------------------------
def unet_compress_forward(x_nchw, conv_w, gamma, beta, run_mean, run_var,
                          *, eps=1e-5):
    """x_nchw: (N, Cin, H, W); conv_w: (Cout, Cin, 4, 4)  (PyTorch layouts)."""
    N, Cin, H, W = x_nchw.shape
    Cout = conv_w.shape[0]
    kh = kw = 4
    stride = 2
    if H % 2 or W % 2:
        raise ValueError("UNetCompress Pallas kernel requires even H, W "
                         "(k=4, s=2, p=1 downsampling).")
    Ho = (H + 2 - kh) // stride + 1      # == H // 2
    Wo = (W + 2 - kw) // stride + 1      # == W // 2
    Coutp = _round_up(Cout, 128)         # lane-dense output channels

    # NCHW -> NHWC + pad.  TODO(synk): in an NHWC end-to-end pipeline these
    # boundary transposes disappear entirely.
    x = jnp.transpose(x_nchw, (0, 2, 3, 1)).astype(jnp.bfloat16)
    x = jnp.pad(x, ((0, 0), (1, 1), (1, 1), (0, 0)))
    # Fold width parity into channels: free reshape of contiguous trailing dims.
    xr = x.reshape(N, H + 2, (W + 2) // 2, 2 * Cin)          # (N, H+2, Wo+1, 2Cin)

    # Eval-mode BatchNorm folded: scale into weights, shift added in the kernel.
    scale = gamma / jnp.sqrt(run_var + eps)                  # (Cout,)
    shift = beta - run_mean * scale                          # (Cout,)

    # (Cout, Cin, kh, kw) -> (kh, kw, Cin, Cout), fold scale, pad lanes,
    # then regroup into (piece = 2*dh + p, [wpar, cin], Coutp).
    w_t = jnp.transpose(conv_w, (2, 3, 1, 0)) * scale[None, None, None, :]
    w_t = jnp.pad(w_t, ((0, 0), (0, 0), (0, 0), (0, Coutp - Cout)))
    w_pieces = (w_t.reshape(kh, 2, 2, Cin, Coutp)            # (dh, p, wpar, cin, co)
                   .reshape(2 * kh, 2 * Cin, Coutp)
                   .astype(jnp.bfloat16))
    shift_p = jnp.pad(shift, (0, Coutp - Cout)).reshape(1, Coutp).astype(jnp.float32)

    kernel = _make_kernel(Ho, Wo, Cin, kh=kh)
    out_flat = pl.pallas_call(
        kernel,
        out_shape=jax.ShapeDtypeStruct((N, Ho * Wo, Coutp), jnp.float32),
        grid_spec=pltpu.PrefetchScalarGridSpec(
            num_scalar_prefetch=0,
            grid=(N,),
            in_specs=[
                pl.BlockSpec((1, H + 2, (W + 2) // 2, 2 * Cin),
                             lambda n: (n, 0, 0, 0)),
                pl.BlockSpec((2 * kh, 2 * Cin, Coutp), lambda n: (0, 0, 0)),
                pl.BlockSpec((1, Coutp), lambda n: (0, 0)),
            ],
            out_specs=pl.BlockSpec((1, Ho * Wo, Coutp), lambda n: (n, 0, 0)),
            scratch_shapes=[
                pltpu.VMEM((Ho * Wo, 2 * Cin), jnp.float32),
                pltpu.VMEM((Ho * Wo, Coutp), jnp.float32),
            ]),
        compiler_params=pltpu.CompilerParams(
            dimension_semantics=("parallel",)),
    )(xr, w_pieces, shift_p)

    # Dropout: eval-mode identity.
    out = out_flat.reshape(N, Ho, Wo, Coutp)[:, :, :, :Cout]
    return jnp.transpose(out, (0, 3, 1, 2))                  # back to NCHW


# -----------------------------------------------------------------------------
# References for correctness checks
# -----------------------------------------------------------------------------
def reference_forward_f32(x, conv_w, gamma, beta, mean, var, eps=1e-5):
    y = lax.conv_general_dilated(
        x, conv_w, window_strides=(2, 2), padding=((1, 1), (1, 1)),
        dimension_numbers=("NCHW", "OIHW", "NCHW"))
    g = gamma.reshape(1, -1, 1, 1)
    b = beta.reshape(1, -1, 1, 1)
    m = mean.reshape(1, -1, 1, 1)
    v = var.reshape(1, -1, 1, 1)
    y = (y - m) / jnp.sqrt(v + eps) * g + b
    return jnp.where(y > 0, y, 0.2 * y)


def reference_forward_bf16(x, conv_w, gamma, beta, mean, var, eps=1e-5):
    # Mirrors the kernel's numerics: bf16-rounded input and (scale-folded) weights,
    # f32 accumulation, then shift-add + LeakyReLU.
    scale = gamma / jnp.sqrt(var + eps)
    shift = beta - mean * scale
    w_f = (conv_w * scale[:, None, None, None]).astype(jnp.bfloat16).astype(jnp.float32)
    x_r = x.astype(jnp.bfloat16).astype(jnp.float32)
    y = lax.conv_general_dilated(
        x_r, w_f, window_strides=(2, 2), padding=((1, 1), (1, 1)),
        dimension_numbers=("NCHW", "OIHW", "NCHW"))
    y = y + shift.reshape(1, -1, 1, 1)
    return jnp.where(y > 0, y, 0.2 * y)


if __name__ == "__main__":
    # Small shapes: batch=2, in_size=4, out_size=8, spatial=16x16
    N, Cin, H, W = 2, 4, 16, 16
    Cout = 8

    key = jax.random.PRNGKey(0)
    kx, kw_ = jax.random.split(key)
    x = jax.random.normal(kx, (N, Cin, H, W), dtype=jnp.float32)

    # Deterministic synthetic parameters (not a checkpoint load)
    conv_w = 0.1 * jax.random.normal(kw_, (Cout, Cin, 4, 4), dtype=jnp.float32)
    gamma = 1.0 + 0.05 * jnp.arange(Cout, dtype=jnp.float32)
    beta = 0.01 * jnp.arange(Cout, dtype=jnp.float32)
    run_mean = 0.02 * jnp.arange(Cout, dtype=jnp.float32)
    run_var = 1.0 + 0.03 * jnp.arange(Cout, dtype=jnp.float32)

    fwd = jax.jit(functools.partial(unet_compress_forward, eps=1e-5))
    out = jax.block_until_ready(fwd(x, conv_w, gamma, beta, run_mean, run_var))
    assert out.shape == (N, Cout, H // 2, W // 2), out.shape

    # Tight check vs. a reference with identical bf16-rounded operands (f32 accum).
    ref_bf16 = reference_forward_bf16(x, conv_w, gamma, beta, run_mean, run_var)
    err = float(jnp.max(jnp.abs(out - ref_bf16)))
    assert err < 1e-3, f"bf16-matched reference mismatch: {err}"

    # Sanity check vs. the pure-f32 module semantics (bf16 input rounding noise).
    ref_f32 = reference_forward_f32(x, conv_w, gamma, beta, run_mean, run_var)
    err32 = float(jnp.max(jnp.abs(out - ref_f32)))
    assert err32 < 1e-1, f"f32 reference sanity-check mismatch: {err32}"

    print("KERNEL_OK")
</pallas_src>

<mosaic_0001>
module attributes {stable_mosaic.version = 11 : i64} {
  func.func @kernel(%arg0: i32, %arg1: memref<1x18x9x8xbf16, #tpu.memory_space<vmem>>, %arg2: memref<8x8x128xbf16, #tpu.memory_space<vmem>>, %arg3: memref<1x128xf32, #tpu.memory_space<vmem>>, %arg4: memref<1x64x128xf32, #tpu.memory_space<vmem>>, %arg5: memref<64x8xf32, #tpu.memory_space<vmem>>, %arg6: memref<64x128xf32, #tpu.memory_space<vmem>>) attributes {dimension_semantics = [#tpu.dimension_semantics<parallel>], iteration_bounds = array<i64: 2>, scalar_prefetch = 0 : i64, scratch_operands = 2 : i64, tpu.core_type = #tpu.core_type<tc>, window_params = [{transform_indices = @transform_0, window_bounds = array<i64: 1, 18, 9, 8>}, {pipeline_mode = #tpu.pipeline_mode<synchronous>, transform_indices = @transform_1, window_bounds = array<i64: 8, 8, 128>}, {pipeline_mode = #tpu.pipeline_mode<synchronous>, transform_indices = @transform_2, window_bounds = array<i64: 1, 128>}, {transform_indices = @transform_3, window_bounds = array<i64: 1, 64, 128>}]} {
    %cst = arith.constant 0.000000e+00 : f32
    %0 = vector.broadcast %cst : f32 to vector<64x128xf32>
    %c0 = arith.constant 0 : index
    %c0_0 = arith.constant 0 : index
    %1 = vector.load %arg6[%c0, %c0_0] : memref<64x128xf32, #tpu.memory_space<vmem>>, vector<64x128xf32>
    tpu.vector_store %arg6[%c0, %c0_0], %0 {strides = array<i32>} : memref<64x128xf32, #tpu.memory_space<vmem>>, vector<64x128xf32>,
    %c0_1 = arith.constant 0 : index
    %c0_2 = arith.constant 0 : index
    %c0_3 = arith.constant 0 : index
    %c0_4 = arith.constant 0 : index
    %2 = vector.load %arg1[%c0_1, %c0_2, %c0_3, %c0_4] : memref<1x18x9x8xbf16, #tpu.memory_space<vmem>>, vector<1x1x8x8xbf16>
    %3 = vector.shape_cast %2 : vector<1x1x8x8xbf16> to vector<8x8xbf16>
    %4 = arith.extf %3 : vector<8x8xbf16> to vector<8x8xf32>
    %c0_5 = arith.constant 0 : index
    %c0_6 = arith.constant 0 : index
    %5 = vector.load %arg5[%c0_5, %c0_6] : memref<64x8xf32, #tpu.memory_space<vmem>>, vector<8x8xf32>
    tpu.vector_store %arg5[%c0_5, %c0_6], %4 {strides = array<i32>} : memref<64x8xf32, #tpu.memory_space<vmem>>, vector<8x8xf32>,
    %c0_7 = arith.constant 0 : index
    %c2 = arith.constant 2 : index
    %c0_8 = arith.constant 0 : index
    %c0_9 = arith.constant 0 : index
    %6 = vector.load %arg1[%c0_7, %c2, %c0_8, %c0_9] : memref<1x18x9x8xbf16, #tpu.memory_space<vmem>>, vector<1x1x8x8xbf16>
    %7 = vector.shape_cast %6 : vector<1x1x8x8xbf16> to vector<8x8xbf16>
    %8 = arith.extf %7 : vector<8x8xbf16> to vector<8x8xf32>
    %c8 = arith.constant 8 : index
    %c0_10 = arith.constant 0 : index
    %9 = vector.load %arg5[%c8, %c0_10] : memref<64x8xf32, #tpu.memory_space<vmem>>, vector<8x8xf32>
    tpu.vector_store %arg5[%c8, %c0_10], %8 {strides = array<i32>} : memref<64x8xf32, #tpu.memory_space<vmem>>, vector<8x8xf32>,
    %c0_11 = arith.constant 0 : index
    %c4 = arith.constant 4 : index
    %c0_12 = arith.constant 0 : index
    %c0_13 = arith.constant 0 : index
    %10 = vector.load %arg1[%c0_11, %c4, %c0_12, %c0_13] : memref<1x18x9x8xbf16, #tpu.memory_space<vmem>>, vector<1x1x8x8xbf16>
    %11 = vector.shape_cast %10 : vector<1x1x8x8xbf16> to vector<8x8xbf16>
    %12 = arith.extf %11 : vector<8x8xbf16> to vector<8x8xf32>
    %c16 = arith.constant 16 : index
    %c0_14 = arith.constant 0 : index
    %13 = vector.load %arg5[%c16, %c0_14] : memref<64x8xf32, #tpu.memory_space<vmem>>, vector<8x8xf32>
    tpu.vector_store %arg5[%c16, %c0_14], %12 {strides = array<i32>} : memref<64x8xf32, #tpu.memory_space<vmem>>, vector<8x8xf32>,
    %c0_15 = arith.constant 0 : index
    %c6 = arith.constant 6 : index
    %c0_16 = arith.constant 0 : index
    %c0_17 = arith.constant 0 : index
    %14 = vector.load %arg1[%c0_15, %c6, %c0_16, %c0_17] : memref<1x18x9x8xbf16, #tpu.memory_space<vmem>>, vector<1x1x8x8xbf16>
    %15 = vector.shape_cast %14 : vector<1x1x8x8xbf16> to vector<8x8xbf16>
    %16 = arith.extf %15 : vector<8x8xbf16> to vector<8x8xf32>
    %c24 = arith.constant 24 : index
    %c0_18 = arith.constant 0 : index
    %17 = vector.load %arg5[%c24, %c0_18] : memref<64x8xf32, #tpu.memory_space<vmem>>, vector<8x8xf32>
    tpu.vector_store %arg5[%c24, %c0_18], %16 {strides = array<i32>} : memref<64x8xf32, #tpu.memory_space<vmem>>, vector<8x8xf32>,
    %c0_19 = arith.constant 0 : index
    %c8_20 = arith.constant 8 : index
    %c0_21 = arith.constant 0 : index
    %c0_22 = arith.constant 0 : index
    %18 = vector.load %arg1[%c0_19, %c8_20, %c0_21, %c0_22] : memref<1x18x9x8xbf16, #tpu.memory_space<vmem>>, vector<1x1x8x8xbf16>
    %19 = vector.shape_cast %18 : vector<1x1x8x8xbf16> to vector<8x8xbf16>
    %20 = arith.extf %19 : vector<8x8xbf16> to vector<8x8xf32>
    %c32 = arith.constant 32 : index
    %c0_23 = arith.constant 0 : index
    %21 = vector.load %arg5[%c32, %c0_23] : memref<64x8xf32, #tpu.memory_space<vmem>>, vector<8x8xf32>
    tpu.vector_store %arg5[%c32, %c0_23], %20 {strides = array<i32>} : memref<64x8xf32, #tpu.memory_space<vmem>>, vector<8x8xf32>,
    %c0_24 = arith.constant 0 : index
    %c10 = arith.constant 10 : index
    %c0_25 = arith.constant 0 : index
    %c0_26 = arith.constant 0 : index
    %22 = vector.load %arg1[%c0_24, %c10, %c0_25, %c0_26] : memref<1x18x9x8xbf16, #tpu.memory_space<vmem>>, vector<1x1x8x8xbf16>
    %23 = vector.shape_cast %22 : vector<1x1x8x8xbf16> to vector<8x8xbf16>
    %24 = arith.extf %23 : vector<8x8xbf16> to vector<8x8xf32>
    %c40 = arith.constant 40 : index
    %c0_27 = arith.constant 0 : index
    %25 = vector.load %arg5[%c40, %c0_27] : memref<64x8xf32, #tpu.memory_space<vmem>>, vector<8x8xf32>
    tpu.vector_store %arg5[%c40, %c0_27], %24 {strides = array<i32>} : memref<64x8xf32, #tpu.memory_space<vmem>>, vector<8x8xf32>,
    %c0_28 = arith.constant 0 : index
    %c12 = arith.constant 12 : index
    %c0_29 = arith.constant 0 : index
    %c0_30 = arith.constant 0 : index
    %26 = vector.load %arg1[%c0_28, %c12, %c0_29, %c0_30] : memref<1x18x9x8xbf16, #tpu.memory_space<vmem>>, vector<1x1x8x8xbf16>
    %27 = vector.shape_cast %26 : vector<1x1x8x8xbf16> to vector<8x8xbf16>
    %28 = arith.extf %27 : vector<8x8xbf16> to vector<8x8xf32>
    %c48 = arith.constant 48 : index
    %c0_31 = arith.constant 0 : index
    %29 = vector.load %arg5[%c48, %c0_31] : memref<64x8xf32, #tpu.memory_space<vmem>>, vector<8x8xf32>
    tpu.vector_store %arg5[%c48, %c0_31], %28 {strides = array<i32>} : memref<64x8xf32, #tpu.memory_space<vmem>>, vector<8x8xf32>,
    %c0_32 = arith.constant 0 : index
    %c14 = arith.constant 14 : index
    %c0_33 = arith.constant 0 : index
    %c0_34 = arith.constant 0 : index
    %30 = vector.load %arg1[%c0_32, %c14, %c0_33, %c0_34] : memref<1x18x9x8xbf16, #tpu.memory_space<vmem>>, vector<1x1x8x8xbf16>
    %31 = vector.shape_cast %30 : vector<1x1x8x8xbf16> to vector<8x8xbf16>
    %32 = arith.extf %31 : vector<8x8xbf16> to vector<8x8xf32>
    %c56 = arith.constant 56 : index
    %c0_35 = arith.constant 0 : index
    %33 = vector.load %arg5[%c56, %c0_35] : memref<64x8xf32, #tpu.memory_space<vmem>>, vector<8x8xf32>
    tpu.vector_store %arg5[%c56, %c0_35], %32 {strides = array<i32>} : memref<64x8xf32, #tpu.memory_space<vmem>>, vector<8x8xf32>,
    %c0_36 = arith.constant 0 : index
    %c0_37 = arith.constant 0 : index
    %34 = vector.load %arg6[%c0_36, %c0_37] : memref<64x128xf32, #tpu.memory_space<vmem>>, vector<64x128xf32>
    %c0_38 = arith.constant 0 : index
    %c0_39 = arith.constant 0 : index
    %35 = vector.load %arg5[%c0_38, %c0_39] : memref<64x8xf32, #tpu.memory_space<vmem>>, vector<64x8xf32>
    %36 = arith.truncf %35 : vector<64x8xf32> to vector<64x8xbf16>
    %c0_40 = arith.constant 0 : index
    %c0_41 = arith.constant 0 : index
    %c0_42 = arith.constant 0 : index
    %37 = vector.load %arg2[%c0_40, %c0_41, %c0_42] : memref<8x8x128xbf16, #tpu.memory_space<vmem>>, vector<1x8x128xbf16>
    %38 = vector.shape_cast %37 : vector<1x8x128xbf16> to vector<8x128xbf16>
    %cst_43 = arith.constant dense<0.000000e+00> : vector<64x128xf32>
    %39 = tpu.matmul %36, %38, %cst_43 {dimension_numbers = #tpu.dot_dimension_numbers<[1], [0], [0], [1], [0, 0, 1, 1], [], []>} : vector<64x8xbf16>, vector<8x128xbf16>, vector<64x128xf32> -> vector<64x128xf32>
    %40 = arith.addf %34, %39 : vector<64x128xf32>
    %c0_44 = arith.constant 0 : index
    %c0_45 = arith.constant 0 : index
    %41 = vector.load %arg6[%c0_44, %c0_45] : memref<64x128xf32, #tpu.memory_space<vmem>>, vector<64x128xf32>
    tpu.vector_store %arg6[%c0_44, %c0_45], %40 {strides = array<i32>} : memref<64x128xf32, #tpu.memory_space<vmem>>, vector<64x128xf32>,
    %c0_46 = arith.constant 0 : index
    %c0_47 = arith.constant 0 : index
    %c1 = arith.constant 1 : index
    %c0_48 = arith.constant 0 : index
    %42 = vector.load %arg1[%c0_46, %c0_47, %c1, %c0_48] : memref<1x18x9x8xbf16, #tpu.memory_space<vmem>>, vector<1x1x8x8xbf16>
    %43 = vector.shape_cast %42 : vector<1x1x8x8xbf16> to vector<8x8xbf16>
    %44 = arith.extf %43 : vector<8x8xbf16> to vector<8x8xf32>
    %c0_49 = arith.constant 0 : index
    %c0_50 = arith.constant 0 : index
    %45 = vector.load %arg5[%c0_49, %c0_50] : memref<64x8xf32, #tpu.memory_space<vmem>>, vector<8x8xf32>
    tpu.vector_store %arg5[%c0_49, %c0_50], %44 {strides = array<i32>} : memref<64x8xf32, #tpu.memory_space<vmem>>, vector<8x8xf32>,
    %c0_51 = arith.constant 0 : index
    %c2_52 = arith.constant 2 : index
    %c1_53 = arith.constant 1 : index
    %c0_54 = arith.constant 0 : index
    %46 = vector.load %arg1[%c0_51, %c2_52, %c1_53, %c0_54] : memref<1x18x9x8xbf16, #tpu.memory_space<vmem>>, vector<1x1x8x8xbf16>
    %47 = vector.shape_cast %46 : vector<1x1x8x8xbf16> to vector<8x8xbf16>
    %48 = arith.extf %47 : vector<8x8xbf16> to vector<8x8xf32>
    %c8_55 = arith.constant 8 : index
    %c0_56 = arith.constant 0 : index
    %49 = vector.load %arg5[%c8_55, %c0_56] : memref<64x8xf32, #tpu.memory_space<vmem>>, vector<8x8xf32>
    tpu.vector_store %arg5[%c8_55, %c0_56], %48 {strides = array<i32>} : memref<64x8xf32, #tpu.memory_space<vmem>>, vector<8x8xf32>,
    %c0_57 = arith.constant 0 : index
    %c4_58 = arith.constant 4 : index
    %c1_59 = arith.constant 1 : index
    %c0_60 = arith.constant 0 : index
    %50 = vector.load %arg1[%c0_57, %c4_58, %c1_59, %c0_60] : memref<1x18x9x8xbf16, #tpu.memory_space<vmem>>, vector<1x1x8x8xbf16>
    %51 = vector.shape_cast %50 : vector<1x1x8x8xbf16> to vector<8x8xbf16>
    %52 = arith.extf %51 : vector<8x8xbf16> to vector<8x8xf32>
    %c16_61 = arith.constant 16 : index
    %c0_62 = arith.constant 0 : index
    %53 = vector.load %arg5[%c16_61, %c0_62] : memref<64x8xf32, #tpu.memory_space<vmem>>, vector<8x8xf32>
    tpu.vector_store %arg5[%c16_61, %c0_62], %52 {strides = array<i32>} : memref<64x8xf32, #tpu.memory_space<vmem>>, vector<8x8xf32>,
    %c0_63 = arith.constant 0 : index
    %c6_64 = arith.constant 6 : index
    %c1_65 = arith.constant 1 : index
    %c0_66 = arith.constant 0 : index
    %54 = vector.load %arg1[%c0_63, %c6_64, %c1_65, %c0_66] : memref<1x18x9x8xbf16, #tpu.memory_space<vmem>>, vector<1x1x8x8xbf16>
    %55 = vector.shape_cast %54 : vector<1x1x8x8xbf16> to vector<8x8xbf16>
    %56 = arith.extf %55 : vector<8x8xbf16> to vector<8x8xf32>
    %c24_67 = arith.constant 24 : index
    %c0_68 = arith.constant 0 : index
    %57 = vector.load %arg5[%c24_67, %c0_68] : memref<64x8xf32, #tpu.memory_space<vmem>>, vector<8x8xf32>
    tpu.vector_store %arg5[%c24_67, %c0_68], %56 {strides = array<i32>} : memref<64x8xf32, #tpu.memory_space<vmem>>, vector<8x8xf32>,
    %c0_69 = arith.constant 0 : index
    %c8_70 = arith.constant 8 : index
    %c1_71 = arith.constant 1 : index
    %c0_72 = arith.constant 0 : index
    %58 = vector.load %arg1[%c0_69, %c8_70, %c1_71, %c0_72] : memref<1x18x9x8xbf16, #tpu.memory_space<vmem>>, vector<1x1x8x8xbf16>
    %59 = vector.shape_cast %58 : vector<1x1x8x8xbf16> to vector<8x8xbf16>
    %60 = arith.extf %59 : vector<8x8xbf16> to vector<8x8xf32>
    %c32_73 = arith.constant 32 : index
    %c0_74 = arith.constant 0 : index
    %61 = vector.load %arg5[%c32_73, %c0_74] : memref<64x8xf32, #tpu.memory_space<vmem>>, vector<8x8xf32>
    tpu.vector_store %arg5[%c32_73, %c0_74], %60 {strides = array<i32>} : memref<64x8xf32, #tpu.memory_space<vmem>>, vector<8x8xf32>,
    %c0_75 = arith.constant 0 : index
    %c10_76 = arith.constant 10 : index
    %c1_77 = arith.constant 1 : index
    %c0_78 = arith.constant 0 : index
    %62 = vector.load %arg1[%c0_75, %c10_76, %c1_77, %c0_78] : memref<1x18x9x8xbf16, #tpu.memory_space<vmem>>, vector<1x1x8x8xbf16>
    %63 = vector.shape_cast %62 : vector<1x1x8x8xbf16> to vector<8x8xbf16>
    %64 = arith.extf %63 : vector<8x8xbf16> to vector<8x8xf32>
    %c40_79 = arith.constant 40 : index
    %c0_80 = arith.constant 0 : index
    %65 = vector.load %arg5[%c40_79, %c0_80] : memref<64x8xf32, #tpu.memory_space<vmem>>, vector<8x8xf32>
    tpu.vector_store %arg5[%c40_79, %c0_80], %64 {strides = array<i32>} : memref<64x8xf32, #tpu.memory_space<vmem>>, vector<8x8xf32>,
    %c0_81 = arith.constant 0 : index
    %c12_82 = arith.constant 12 : index
    %c1_83 = arith.constant 1 : index
    %c0_84 = arith.constant 0 : index
    %66 = vector.load %arg1[%c0_81, %c12_82, %c1_83, %c0_84] : memref<1x18x9x8xbf16, #tpu.memory_space<vmem>>, vector<1x1x8x8xbf16>
    %67 = vector.shape_cast %66 : vector<1x1x8x8xbf16> to vector<8x8xbf16>
    %68 = arith.extf %67 : vector<8x8xbf16> to vector<8x8xf32>
    %c48_85 = arith.constant 48 : index
    %c0_86 = arith.constant 0 : index
    %69 = vector.load %arg5[%c48_85, %c0_86] : memref<64x8xf32, #tpu.memory_space<vmem>>, vector<8x8xf32>
    tpu.vector_store %arg5[%c48_85, %c0_86], %68 {strides = array<i32>} : memref<64x8xf32, #tpu.memory_space<vmem>>, vector<8x8xf32>,
    %c0_87 = arith.constant 0 : index
    %c14_88 = arith.constant 14 : index
    %c1_89 = arith.constant 1 : index
    %c0_90 = arith.constant 0 : index
    %70 = vector.load %arg1[%c0_87, %c14_88, %c1_89, %c0_90] : memref<1x18x9x8xbf16, #tpu.memory_space<vmem>>, vector<1x1x8x8xbf16>
    %71 = vector.shape_cast %70 : vector<1x1x8x8xbf16> to vector<8x8xbf16>
    %72 = arith.extf %71 : vector<8x8xbf16> to vector<8x8xf32>
    %c56_91 = arith.constant 56 : index
    %c0_92 = arith.constant 0 : index
    %73 = vector.load %arg5[%c56_91, %c0_92] : memref<64x8xf32, #tpu.memory_space<vmem>>, vector<8x8xf32>
    tpu.vector_store %arg5[%c56_91, %c0_92], %72 {strides = array<i32>} : memref<64x8xf32, #tpu.memory_space<vmem>>, vector<8x8xf32>,
    %c0_93 = arith.constant 0 : index
    %c0_94 = arith.constant 0 : index
    %74 = vector.load %arg6[%c0_93, %c0_94] : memref<64x128xf32, #tpu.memory_space<vmem>>, vector<64x128xf32>
    %c0_95 = arith.constant 0 : index
    %c0_96 = arith.constant 0 : index
    %75 = vector.load %arg5[%c0_95, %c0_96] : memref<64x8xf32, #tpu.memory_space<vmem>>, vector<64x8xf32>
    %76 = arith.truncf %75 : vector<64x8xf32> to vector<64x8xbf16>
    %c1_97 = arith.constant 1 : index
    %c0_98 = arith.constant 0 : index
    %c0_99 = arith.constant 0 : index
    %77 = vector.load %arg2[%c1_97, %c0_98, %c0_99] : memref<8x8x128xbf16, #tpu.memory_space<vmem>>, vector<1x8x128xbf16>
    %78 = vector.shape_cast %77 : vector<1x8x128xbf16> to vector<8x128xbf16>
    %cst_100 = arith.constant dense<0.000000e+00> : vector<64x128xf32>
    %79 = tpu.matmul %76, %78, %cst_100 {dimension_numbers = #tpu.dot_dimension_numbers<[1], [0], [0], [1], [0, 0, 1, 1], [], []>} : vector<64x8xbf16>, vector<8x128xbf16>, vector<64x128xf32> -> vector<64x128xf32>
    %80 = arith.addf %74, %79 : vector<64x128xf32>
    %c0_101 = arith.constant 0 : index
    %c0_102 = arith.constant 0 : index
    %81 = vector.load %arg6[%c0_101, %c0_102] : memref<64x128xf32, #tpu.memory_space<vmem>>, vector<64x128xf32>
    tpu.vector_store %arg6[%c0_101, %c0_102], %80 {strides = array<i32>} : memref<64x128xf32, #tpu.memory_space<vmem>>, vector<64x128xf32>,
    %c0_103 = arith.constant 0 : index
    %c1_104 = arith.constant 1 : index
    %c0_105 = arith.constant 0 : index
    %c0_106 = arith.constant 0 : index
    %82 = vector.load %arg1[%c0_103, %c1_104, %c0_105, %c0_106] : memref<1x18x9x8xbf16, #tpu.memory_space<vmem>>, vector<1x1x8x8xbf16>
    %83 = vector.shape_cast %82 : vector<1x1x8x8xbf16> to vector<8x8xbf16>
    %84 = arith.extf %83 : vector<8x8xbf16> to vector<8x8xf32>
    %c0_107 = arith.constant 0 : index
    %c0_108 = arith.constant 0 : index
    %85 = vector.load %arg5[%c0_107, %c0_108] : memref<64x8xf32, #tpu.memory_space<vmem>>, vector<8x8xf32>
    tpu.vector_store %arg5[%c0_107, %c0_108], %84 {strides = array<i32>} : memref<64x8xf32, #tpu.memory_space<vmem>>, vector<8x8xf32>,
    %c0_109 = arith.constant 0 : index
    %c3 = arith.constant 3 : index
    %c0_110 = arith.constant 0 : index
    %c0_111 = arith.constant 0 : index
    %86 = vector.load %arg1[%c0_109, %c3, %c0_110, %c0_111] : memref<1x18x9x8xbf16, #tpu.memory_space<vmem>>, vector<1x1x8x8xbf16>
    %87 = vector.shape_cast %86 : vector<1x1x8x8xbf16> to vector<8x8xbf16>
    %88 = arith.extf %87 : vector<8x8xbf16> to vector<8x8xf32>
    %c8_112 = arith.constant 8 : index
    %c0_113 = arith.constant 0 : index
    %89 = vector.load %arg5[%c8_112, %c0_113] : memref<64x8xf32, #tpu.memory_space<vmem>>, vector<8x8xf32>
    tpu.vector_store %arg5[%c8_112, %c0_113], %88 {strides = array<i32>} : memref<64x8xf32, #tpu.memory_space<vmem>>, vector<8x8xf32>,
    %c0_114 = arith.constant 0 : index
    %c5 = arith.constant 5 : index
    %c0_115 = arith.constant 0 : index
    %c0_116 = arith.constant 0 : index
    %90 = vector.load %arg1[%c0_114, %c5, %c0_115, %c0_116] : memref<1x18x9x8xbf16, #tpu.memory_space<vmem>>, vector<1x1x8x8xbf16>
    %91 = vector.shape_cast %90 : vector<1x1x8x8xbf16> to vector<8x8xbf16>
    %92 = arith.extf %91 : vector<8x8xbf16> to vector<8x8xf32>
    %c16_117 = arith.constant 16 : index
    %c0_118 = arith.constant 0 : index
    %93 = vector.load %arg5[%c16_117, %c0_118] : memref<64x8xf32, #tpu.memory_space<vmem>>, vector<8x8xf32>
    tpu.vector_store %arg5[%c16_117, %c0_118], %92 {strides = array<i32>} : memref<64x8xf32, #tpu.memory_space<vmem>>, vector<8x8xf32>,
    %c0_119 = arith.constant 0 : index
    %c7 = arith.constant 7 : index
    %c0_120 = arith.constant 0 : index
    %c0_121 = arith.constant 0 : index
    %94 = vector.load %arg1[%c0_119, %c7, %c0_120, %c0_121] : memref<1x18x9x8xbf16, #tpu.memory_space<vmem>>, vector<1x1x8x8xbf16>
    %95 = vector.shape_cast %94 : vector<1x1x8x8xbf16> to vector<8x8xbf16>
    %96 = arith.extf %95 : vector<8x8xbf16> to vector<8x8xf32>
    %c24_122 = arith.constant 24 : index
    %c0_123 = arith.constant 0 : index
    %97 = vector.load %arg5[%c24_122, %c0_123] : memref<64x8xf32, #tpu.memory_space<vmem>>, vector<8x8xf32>
    tpu.vector_store %arg5[%c24_122, %c0_123], %96 {strides = array<i32>} : memref<64x8xf32, #tpu.memory_space<vmem>>, vector<8x8xf32>,
    %c0_124 = arith.constant 0 : index
    %c9 = arith.constant 9 : index
    %c0_125 = arith.constant 0 : index
    %c0_126 = arith.constant 0 : index
    %98 = vector.load %arg1[%c0_124, %c9, %c0_125, %c0_126] : memref<1x18x9x8xbf16, #tpu.memory_space<vmem>>, vector<1x1x8x8xbf16>
    %99 = vector.shape_cast %98 : vector<1x1x8x8xbf16> to vector<8x8xbf16>
    %100 = arith.extf %99 : vector<8x8xbf16> to vector<8x8xf32>
    %c32_127 = arith.constant 32 : index
    %c0_128 = arith.constant 0 : index
    %101 = vector.load %arg5[%c32_127, %c0_128] : memref<64x8xf32, #tpu.memory_space<vmem>>, vector<8x8xf32>
    tpu.vector_store %arg5[%c32_127, %c0_128], %100 {strides = array<i32>} : memref<64x8xf32, #tpu.memory_space<vmem>>, vector<8x8xf32>,
    %c0_129 = arith.constant 0 : index
    %c11 = arith.constant 11 : index
    %c0_130 = arith.constant 0 : index
    %c0_131 = arith.constant 0 : index
    %102 = vector.load %arg1[%c0_129, %c11, %c0_130, %c0_131] : memref<1x18x9x8xbf16, #tpu.memory_space<vmem>>, vector<1x1x8x8xbf16>
    %103 = vector.shape_cast %102 : vector<1x1x8x8xbf16> to vector<8x8xbf16>
    %104 = arith.extf %103 : vector<8x8xbf16> to vector<8x8xf32>
    %c40_132 = arith.constant 40 : index
    %c0_133 = arith.constant 0 : index
    %105 = vector.load %arg5[%c40_132, %c0_133] : memref<64x8xf32, #tpu.memory_space<vmem>>, vector<8x8xf32>
    tpu.vector_store %arg5[%c40_132, %c0_133], %104 {strides = array<i32>} : memref<64x8xf32, #tpu.memory_space<vmem>>, vector<8x8xf32>,
    %c0_134 = arith.constant 0 : index
    %c13 = arith.constant 13 : index
    %c0_135 = arith.constant 0 : index
    %c0_136 = arith.constant 0 : index
    %106 = vector.load %arg1[%c0_134, %c13, %c0_135, %c0_136] : memref<1x18x9x8xbf16, #tpu.memory_space<vmem>>, vector<1x1x8x8xbf16>
    %107 = vector.shape_cast %106 : vector<1x1x8x8xbf16> to vector<8x8xbf16>
    %108 = arith.extf %107 : vector<8x8xbf16> to vector<8x8xf32>
    %c48_137 = arith.constant 48 : index
    %c0_138 = arith.constant 0 : index
    %109 = vector.load %arg5[%c48_137, %c0_138] : memref<64x8xf32, #tpu.memory_space<vmem>>, vector<8x8xf32>
    tpu.vector_store %arg5[%c48_137, %c0_138], %108 {strides = array<i32>} : memref<64x8xf32, #tpu.memory_space<vmem>>, vector<8x8xf32>,
    %c0_139 = arith.constant 0 : index
    %c15 = arith.constant 15 : index
    %c0_140 = arith.constant 0 : index
    %c0_141 = arith.constant 0 : index
    %110 = vector.load %arg1[%c0_139, %c15, %c0_140, %c0_141] : memref<1x18x9x8xbf16, #tpu.memory_space<vmem>>, vector<1x1x8x8xbf16>
    %111 = vector.shape_cast %110 : vector<1x1x8x8xbf16> to vector<8x8xbf16>
    %112 = arith.extf %111 : vector<8x8xbf16> to vector<8x8xf32>
    %c56_142 = arith.constant 56 : index
    %c0_143 = arith.constant 0 : index
    %113 = vector.load %arg5[%c56_142, %c0_143] : memref<64x8xf32, #tpu.memory_space<vmem>>, vector<8x8xf32>
    tpu.vector_store %arg5[%c56_142, %c0_143], %112 {strides = array<i32>} : memref<64x8xf32, #tpu.memory_space<vmem>>, vector<8x8xf32>,
    %c0_144 = arith.constant 0 : index
    %c0_145 = arith.constant 0 : index
    %114 = vector.load %arg6[%c0_144, %c0_145] : memref<64x128xf32, #tpu.memory_space<vmem>>, vector<64x128xf32>
    %c0_146 = arith.constant 0 : index
    %c0_147 = arith.constant 0 : index
    %115 = vector.load %arg5[%c0_146, %c0_147] : memref<64x8xf32, #tpu.memory_space<vmem>>, vector<64x8xf32>
    %116 = arith.truncf %115 : vector<64x8xf32> to vector<64x8xbf16>
    %c2_148 = arith.constant 2 : index
    %c0_149 = arith.constant 0 : index
    %c0_150 = arith.constant 0 : index
    %117 = vector.load %arg2[%c2_148, %c0_149, %c0_150] : memref<8x8x128xbf16, #tpu.memory_space<vmem>>, vector<1x8x128xbf16>
    %118 = vector.shape_cast %117 : vector<1x8x128xbf16> to vector<8x128xbf16>
    %cst_151 = arith.constant dense<0.000000e+00> : vector<64x128xf32>
    %119 = tpu.matmul %116, %118, %cst_151 {dimension_numbers = #tpu.dot_dimension_numbers<[1], [0], [0], [1], [0, 0, 1, 1], [], []>} : vector<64x8xbf16>, vector<8x128xbf16>, vector<64x128xf32> -> vector<64x128xf32>
    %120 = arith.addf %114, %119 : vector<64x128xf32>
    %c0_152 = arith.constant 0 : index
    %c0_153 = arith.constant 0 : index
    %121 = vector.load %arg6[%c0_152, %c0_153] : memref<64x128xf32, #tpu.memory_space<vmem>>, vector<64x128xf32>
    tpu.vector_store %arg6[%c0_152, %c0_153], %120 {strides = array<i32>} : memref<64x128xf32, #tpu.memory_space<vmem>>, vector<64x128xf32>,
    %c0_154 = arith.constant 0 : index
    %c1_155 = arith.constant 1 : index
    %c1_156 = arith.constant 1 : index
    %c0_157 = arith.constant 0 : index
    %122 = vector.load %arg1[%c0_154, %c1_155, %c1_156, %c0_157] : memref<1x18x9x8xbf16, #tpu.memory_space<vmem>>, vector<1x1x8x8xbf16>
    %123 = vector.shape_cast %122 : vector<1x1x8x8xbf16> to vector<8x8xbf16>
    %124 = arith.extf %123 : vector<8x8xbf16> to vector<8x8xf32>
    %c0_158 = arith.constant 0 : index
    %c0_159 = arith.constant 0 : index
    %125 = vector.load %arg5[%c0_158, %c0_159] : memref<64x8xf32, #tpu.memory_space<vmem>>, vector<8x8xf32>
    tpu.vector_store %arg5[%c0_158, %c0_159], %124 {strides = array<i32>} : memref<64x8xf32, #tpu.memory_space<vmem>>, vector<8x8xf32>,
    %c0_160 = arith.constant 0 : index
    %c3_161 = arith.constant 3 : index
    %c1_162 = arith.constant 1 : index
    %c0_163 = arith.constant 0 : index
    %126 = vector.load %arg1[%c0_160, %c3_161, %c1_162, %c0_163] : memref<1x18x9x8xbf16, #tpu.memory_space<vmem>>, vector<1x1x8x8xbf16>
    %127 = vector.shape_cast %126 : vector<1x1x8x8xbf16> to vector<8x8xbf16>
    %128 = arith.extf %127 : vector<8x8xbf16> to vector<8x8xf32>
    %c8_164 = arith.constant 8 : index
    %c0_165 = arith.constant 0 : index
    %129 = vector.load %arg5[%c8_164, %c0_165] : memref<64x8xf32, #tpu.memory_space<vmem>>, vector<8x8xf32>
    tpu.vector_store %arg5[%c8_164, %c0_165], %128 {strides = array<i32>} : memref<64x8xf32, #tpu.memory_space<vmem>>, vector<8x8xf32>,
    %c0_166 = arith.constant 0 : index
    %c5_167 = arith.constant 5 : index
    %c1_168 = arith.constant 1 : index
    %c0_169 = arith.constant 0 : index
    %130 = vector.load %arg1[%c0_166, %c5_167, %c1_168, %c0_169] : memref<1x18x9x8xbf16, #tpu.memory_space<vmem>>, vector<1x1x8x8xbf16>
    %131 = vector.shape_cast %130 : vector<1x1x8x8xbf16> to vector<8x8xbf16>
    %132 = arith.extf %131 : vector<8x8xbf16> to vector<8x8xf32>
    %c16_170 = arith.constant 16 : index
    %c0_171 = arith.constant 0 : index
    %133 = vector.load %arg5[%c16_170, %c0_171] : memref<64x8xf32, #tpu.memory_space<vmem>>, vector<8x8xf32>
    tpu.vector_store %arg5[%c16_170, %c0_171], %132 {strides = array<i32>} : memref<64x8xf32, #tpu.memory_space<vmem>>, vector<8x8xf32>,
    %c0_172 = arith.constant 0 : index
    %c7_173 = arith.constant 7 : index
    %c1_174 = arith.constant 1 : index
    %c0_175 = arith.constant 0 : index
    %134 = vector.load %arg1[%c0_172, %c7_173, %c1_174, %c0_175] : memref<1x18x9x8xbf16, #tpu.memory_space<vmem>>, vector<1x1x8x8xbf16>
    %135 = vector.shape_cast %134 : vector<1x1x8x8xbf16> to vector<8x8xbf16>
    %136 = arith.extf %135 : vector<8x8xbf16> to vector<8x8xf32>
    %c24_176 = arith.constant 24 : index
    %c0_177 = arith.constant 0 : index
    %137 = vector.load %arg5[%c24_176, %c0_177] : memref<64x8xf32, #tpu.memory_space<vmem>>, vector<8x8xf32>
    tpu.vector_store %arg5[%c24_176, %c0_177], %136 {strides = array<i32>} : memref<64x8xf32, #tpu.memory_space<vmem>>, vector<8x8xf32>,
    %c0_178 = arith.constant 0 : index
    %c9_179 = arith.constant 9 : index
    %c1_180 = arith.constant 1 : index
    %c0_181 = arith.constant 0 : index
    %138 = vector.load %arg1[%c0_178, %c9_179, %c1_180, %c0_181] : memref<1x18x9x8xbf16, #tpu.memory_space<vmem>>, vector<1x1x8x8xbf16>
    %139 = vector.shape_cast %138 : vector<1x1x8x8xbf16> to vector<8x8xbf16>
    %140 = arith.extf %139 : vector<8x8xbf16> to vector<8x8xf32>
    %c32_182 = arith.constant 32 : index
    %c0_183 = arith.constant 0 : index
    %141 = vector.load %arg5[%c32_182, %c0_183] : memref<64x8xf32, #tpu.memory_space<vmem>>, vector<8x8xf32>
    tpu.vector_store %arg5[%c32_182, %c0_183], %140 {strides = array<i32>} : memref<64x8xf32, #tpu.memory_space<vmem>>, vector<8x8xf32>,
    %c0_184 = arith.constant 0 : index
    %c11_185 = arith.constant 11 : index
    %c1_186 = arith.constant 1 : index
    %c0_187 = arith.constant 0 : index
    %142 = vector.load %arg1[%c0_184, %c11_185, %c1_186, %c0_187] : memref<1x18x9x8xbf16, #tpu.memory_space<vmem>>, vector<1x1x8x8xbf16>
    %143 = vector.shape_cast %142 : vector<1x1x8x8xbf16> to vector<8x8xbf16>
    %144 = arith.extf %143 : vector<8x8xbf16> to vector<8x8xf32>
    %c40_188 = arith.constant 40 : index
    %c0_189 = arith.constant 0 : index
    %145 = vector.load %arg5[%c40_188, %c0_189] : memref<64x8xf32, #tpu.memory_space<vmem>>, vector<8x8xf32>
    tpu.vector_store %arg5[%c40_188, %c0_189], %144 {strides = array<i32>} : memref<64x8xf32, #tpu.memory_space<vmem>>, vector<8x8xf32>,
    %c0_190 = arith.constant 0 : index
    %c13_191 = arith.constant 13 : index
    %c1_192 = arith.constant 1 : index
    %c0_193 = arith.constant 0 : index
    %146 = vector.load %arg1[%c0_190, %c13_191, %c1_192, %c0_193] : memref<1x18x9x8xbf16, #tpu.memory_space<vmem>>, vector<1x1x8x8xbf16>
    %147 = vector.shape_cast %146 : vector<1x1x8x8xbf16> to vector<8x8xbf16>
    %148 = arith.extf %147 : vector<8x8xbf16> to vector<8x8xf32>
    %c48_194 = arith.constant 48 : index
    %c0_195 = arith.constant 0 : index
    %149 = vector.load %arg5[%c48_194, %c0_195] : memref<64x8xf32, #tpu.memory_space<vmem>>, vector<8x8xf32>
    tpu.vector_store %arg5[%c48_194, %c0_195], %148 {strides = array<i32>} : memref<64x8xf32, #tpu.memory_space<vmem>>, vector<8x8xf32>,
    %c0_196 = arith.constant 0 : index
    %c15_197 = arith.constant 15 : index
    %c1_198 = arith.constant 1 : index
    %c0_199 = arith.constant 0 : index
    %150 = vector.load %arg1[%c0_196, %c15_197, %c1_198, %c0_199] : memref<1x18x9x8xbf16, #tpu.memory_space<vmem>>, vector<1x1x8x8xbf16>
    %151 = vector.shape_cast %150 : vector<1x1x8x8xbf16> to vector<8x8xbf16>
    %152 = arith.extf %151 : vector<8x8xbf16> to vector<8x8xf32>
    %c56_200 = arith.constant 56 : index
    %c0_201 = arith.constant 0 : index
    %153 = vector.load %arg5[%c56_200, %c0_201] : memref<64x8xf32, #tpu.memory_space<vmem>>, vector<8x8xf32>
    tpu.vector_store %arg5[%c56_200, %c0_201], %152 {strides = array<i32>} : memref<64x8xf32, #tpu.memory_space<vmem>>, vector<8x8xf32>,
    %c0_202 = arith.constant 0 : index
    %c0_203 = arith.constant 0 : index
    %154 = vector.load %arg6[%c0_202, %c0_203] : memref<64x128xf32, #tpu.memory_space<vmem>>, vector<64x128xf32>
    %c0_204 = arith.constant 0 : index
    %c0_205 = arith.constant 0 : index
    %155 = vector.load %arg5[%c0_204, %c0_205] : memref<64x8xf32, #tpu.memory_space<vmem>>, vector<64x8xf32>
    %156 = arith.truncf %155 : vector<64x8xf32> to vector<64x8xbf16>
    %c3_206 = arith.constant 3 : index
    %c0_207 = arith.constant 0 : index
    %c0_208 = arith.constant 0 : index
    %157 = vector.load %arg2[%c3_206, %c0_207, %c0_208] : memref<8x8x128xbf16, #tpu.memory_space<vmem>>, vector<1x8x128xbf16>
    %158 = vector.shape_cast %157 : vector<1x8x128xbf16> to vector<8x128xbf16>
    %cst_209 = arith.constant dense<0.000000e+00> : vector<64x128xf32>
    %159 = tpu.matmul %156, %158, %cst_209 {dimension_numbers = #tpu.dot_dimension_numbers<[1], [0], [0], [1], [0, 0, 1, 1], [], []>} : vector<64x8xbf16>, vector<8x128xbf16>, vector<64x128xf32> -> vector<64x128xf32>
    %160 = arith.addf %154, %159 : vector<64x128xf32>
    %c0_210 = arith.constant 0 : index
    %c0_211 = arith.constant 0 : index
    %161 = vector.load %arg6[%c0_210, %c0_211] : memref<64x128xf32, #tpu.memory_space<vmem>>, vector<64x128xf32>
    tpu.vector_store %arg6[%c0_210, %c0_211], %160 {strides = array<i32>} : memref<64x128xf32, #tpu.memory_space<vmem>>, vector<64x128xf32>,
    %c0_212 = arith.constant 0 : index
    %c2_213 = arith.constant 2 : index
    %c0_214 = arith.constant 0 : index
    %c0_215 = arith.constant 0 : index
    %162 = vector.load %arg1[%c0_212, %c2_213, %c0_214, %c0_215] : memref<1x18x9x8xbf16, #tpu.memory_space<vmem>>, vector<1x1x8x8xbf16>
    %163 = vector.shape_cast %162 : vector<1x1x8x8xbf16> to vector<8x8xbf16>
    %164 = arith.extf %163 : vector<8x8xbf16> to vector<8x8xf32>
    %c0_216 = arith.constant 0 : index
    %c0_217 = arith.constant 0 : index
    %165 = vector.load %arg5[%c0_216, %c0_217] : memref<64x8xf32, #tpu.memory_space<vmem>>, vector<8x8xf32>
    tpu.vector_store %arg5[%c0_216, %c0_217], %164 {strides = array<i32>} : memref<64x8xf32, #tpu.memory_space<vmem>>, vector<8x8xf32>,
    %c0_218 = arith.constant 0 : index
    %c4_219 = arith.constant 4 : index
    %c0_220 = arith.constant 0 : index
    %c0_221 = arith.constant 0 : index
    %166 = vector.load %arg1[%c0_218, %c4_219, %c0_220, %c0_221] : memref<1x18x9x8xbf16, #tpu.memory_space<vmem>>, vector<1x1x8x8xbf16>
    %167 = vector.shape_cast %166 : vector<1x1x8x8xbf16> to vector<8x8xbf16>
    %168 = arith.extf %167 : vector<8x8xbf16> to vector<8x8xf32>
    %c8_222 = arith.constant 8 : index
    %c0_223 = arith.constant 0 : index
    %169 = vector.load %arg5[%c8_222, %c0_223] : memref<64x8xf32, #tpu.memory_space<vmem>>, vector<8x8xf32>
    tpu.vector_store %arg5[%c8_222, %c0_223], %168 {strides = array<i32>} : memref<64x8xf32, #tpu.memory_space<vmem>>, vector<8x8xf32>,
    %c0_224 = arith.constant 0 : index
    %c6_225 = arith.constant 6 : index
    %c0_226 = arith.constant 0 : index
    %c0_227 = arith.constant 0 : index
    %170 = vector.load %arg1[%c0_224, %c6_225, %c0_226, %c0_227] : memref<1x18x9x8xbf16, #tpu.memory_space<vmem>>, vector<1x1x8x8xbf16>
    %171 = vector.shape_cast %170 : vector<1x1x8x8xbf16> to vector<8x8xbf16>
    %172 = arith.extf %171 : vector<8x8xbf16> to vector<8x8xf32>
    %c16_228 = arith.constant 16 : index
    %c0_229 = arith.constant 0 : index
    %173 = vector.load %arg5[%c16_228, %c0_229] : memref<64x8xf32, #tpu.memory_space<vmem>>, vector<8x8xf32>
    tpu.vector_store %arg5[%c16_228, %c0_229], %172 {strides = array<i32>} : memref<64x8xf32, #tpu.memory_space<vmem>>, vector<8x8xf32>,
    %c0_230 = arith.constant 0 : index
    %c8_231 = arith.constant 8 : index
    %c0_232 = arith.constant 0 : index
    %c0_233 = arith.constant 0 : index
    %174 = vector.load %arg1[%c0_230, %c8_231, %c0_232, %c0_233] : memref<1x18x9x8xbf16, #tpu.memory_space<vmem>>, vector<1x1x8x8xbf16>
    %175 = vector.shape_cast %174 : vector<1x1x8x8xbf16> to vector<8x8xbf16>
    %176 = arith.extf %175 : vector<8x8xbf16> to vector<8x8xf32>
    %c24_234 = arith.constant 24 : index
    %c0_235 = arith.constant 0 : index
    %177 = vector.load %arg5[%c24_234, %c0_235] : memref<64x8xf32, #tpu.memory_space<vmem>>, vector<8x8xf32>
    tpu.vector_store %arg5[%c24_234, %c0_235], %176 {strides = array<i32>} : memref<64x8xf32, #tpu.memory_space<vmem>>, vector<8x8xf32>,
    %c0_236 = arith.constant 0 : index
    %c10_237 = arith.constant 10 : index
    %c0_238 = arith.constant 0 : index
    %c0_239 = arith.constant 0 : index
    %178 = vector.load %arg1[%c0_236, %c10_237, %c0_238, %c0_239] : memref<1x18x9x8xbf16, #tpu.memory_space<vmem>>, vector<1x1x8x8xbf16>
    %179 = vector.shape_cast %178 : vector<1x1x8x8xbf16> to vector<8x8xbf16>
    %180 = arith.extf %179 : vector<8x8xbf16> to vector<8x8xf32>
    %c32_240 = arith.constant 32 : index
    %c0_241 = arith.constant 0 : index
    %181 = vector.load %arg5[%c32_240, %c0_241] : memref<64x8xf32, #tpu.memory_space<vmem>>, vector<8x8xf32>
    tpu.vector_store %arg5[%c32_240, %c0_241], %180 {strides = array<i32>} : memref<64x8xf32, #tpu.memory_space<vmem>>, vector<8x8xf32>,
    %c0_242 = arith.constant 0 : index
    %c12_243 = arith.constant 12 : index
    %c0_244 = arith.constant 0 : index
    %c0_245 = arith.constant 0 : index
    %182 = vector.load %arg1[%c0_242, %c12_243, %c0_244, %c0_245] : memref<1x18x9x8xbf16, #tpu.memory_space<vmem>>, vector<1x1x8x8xbf16>
    %183 = vector.shape_cast %182 : vector<1x1x8x8xbf16> to vector<8x8xbf16>
    %184 = arith.extf %183 : vector<8x8xbf16> to vector<8x8xf32>
    %c40_246 = arith.constant 40 : index
    %c0_247 = arith.constant 0 : index
    %185 = vector.load %arg5[%c40_246, %c0_247] : memref<64x8xf32, #tpu.memory_space<vmem>>, vector<8x8xf32>
    tpu.vector_store %arg5[%c40_246, %c0_247], %184 {strides = array<i32>} : memref<64x8xf32, #tpu.memory_space<vmem>>, vector<8x8xf32>,
    %c0_248 = arith.constant 0 : index
    %c14_249 = arith.constant 14 : index
    %c0_250 = arith.constant 0 : index
    %c0_251 = arith.constant 0 : index
    %186 = vector.load %arg1[%c0_248, %c14_249, %c0_250, %c0_251] : memref<1x18x9x8xbf16, #tpu.memory_space<vmem>>, vector<1x1x8x8xbf16>
    %187 = vector.shape_cast %186 : vector<1x1x8x8xbf16> to vector<8x8xbf16>
    %188 = arith.extf %187 : vector<8x8xbf16> to vector<8x8xf32>
    %c48_252 = arith.constant 48 : index
    %c0_253 = arith.constant 0 : index
    %189 = vector.load %arg5[%c48_252, %c0_253] : memref<64x8xf32, #tpu.memory_space<vmem>>, vector<8x8xf32>
    tpu.vector_store %arg5[%c48_252, %c0_253], %188 {strides = array<i32>} : memref<64x8xf32, #tpu.memory_space<vmem>>, vector<8x8xf32>,
    %c0_254 = arith.constant 0 : index
    %c16_255 = arith.constant 16 : index
    %c0_256 = arith.constant 0 : index
    %c0_257 = arith.constant 0 : index
    %190 = vector.load %arg1[%c0_254, %c16_255, %c0_256, %c0_257] : memref<1x18x9x8xbf16, #tpu.memory_space<vmem>>, vector<1x1x8x8xbf16>
    %191 = vector.shape_cast %190 : vector<1x1x8x8xbf16> to vector<8x8xbf16>
    %192 = arith.extf %191 : vector<8x8xbf16> to vector<8x8xf32>
    %c56_258 = arith.constant 56 : index
    %c0_259 = arith.constant 0 : index
    %193 = vector.load %arg5[%c56_258, %c0_259] : memref<64x8xf32, #tpu.memory_space<vmem>>, vector<8x8xf32>
    tpu.vector_store %arg5[%c56_258, %c0_259], %192 {strides = array<i32>} : memref<64x8xf32, #tpu.memory_space<vmem>>, vector<8x8xf32>,
    %c0_260 = arith.constant 0 : index
    %c0_261 = arith.constant 0 : index
    %194 = vector.load %arg6[%c0_260, %c0_261] : memref<64x128xf32, #tpu.memory_space<vmem>>, vector<64x128xf32>
    %c0_262 = arith.constant 0 : index
    %c0_263 = arith.constant 0 : index
    %195 = vector.load %arg5[%c0_262, %c0_263] : memref<64x8xf32, #tpu.memory_space<vmem>>, vector<64x8xf32>
    %196 = arith.truncf %195 : vector<64x8xf32> to vector<64x8xbf16>
    %c4_264 = arith.constant 4 : index
    %c0_265 = arith.constant 0 : index
    %c0_266 = arith.constant 0 : index
    %197 = vector.load %arg2[%c4_264, %c0_265, %c0_266] : memref<8x8x128xbf16, #tpu.memory_space<vmem>>, vector<1x8x128xbf16>
    %198 = vector.shape_cast %197 : vector<1x8x128xbf16> to vector<8x128xbf16>
    %cst_267 = arith.constant dense<0.000000e+00> : vector<64x128xf32>
    %199 = tpu.matmul %196, %198, %cst_267 {dimension_numbers = #tpu.dot_dimension_numbers<[1], [0], [0], [1], [0, 0, 1, 1], [], []>} : vector<64x8xbf16>, vector<8x128xbf16>, vector<64x128xf32> -> vector<64x128xf32>
    %200 = arith.addf %194, %199 : vector<64x128xf32>
    %c0_268 = arith.constant 0 : index
    %c0_269 = arith.constant 0 : index
    %201 = vector.load %arg6[%c0_268, %c0_269] : memref<64x128xf32, #tpu.memory_space<vmem>>, vector<64x128xf32>
    tpu.vector_store %arg6[%c0_268, %c0_269], %200 {strides = array<i32>} : memref<64x128xf32, #tpu.memory_space<vmem>>, vector<64x128xf32>,
    %c0_270 = arith.constant 0 : index
    %c2_271 = arith.constant 2 : index
    %c1_272 = arith.constant 1 : index
    %c0_273 = arith.constant 0 : index
    %202 = vector.load %arg1[%c0_270, %c2_271, %c1_272, %c0_273] : memref<1x18x9x8xbf16, #tpu.memory_space<vmem>>, vector<1x1x8x8xbf16>
    %203 = vector.shape_cast %202 : vector<1x1x8x8xbf16> to vector<8x8xbf16>
    %204 = arith.extf %203 : vector<8x8xbf16> to vector<8x8xf32>
    %c0_274 = arith.constant 0 : index
    %c0_275 = arith.constant 0 : index
    %205 = vector.load %arg5[%c0_274, %c0_275] : memref<64x8xf32, #tpu.memory_space<vmem>>, vector<8x8xf32>
    tpu.vector_store %arg5[%c0_274, %c0_275], %204 {strides = array<i32>} : memref<64x8xf32, #tpu.memory_space<vmem>>, vector<8x8xf32>,
    %c0_276 = arith.constant 0 : index
    %c4_277 = arith.constant 4 : index
    %c1_278 = arith.constant 1 : index
    %c0_279 = arith.constant 0 : index
    %206 = vector.load %arg1[%c0_276, %c4_277, %c1_278, %c0_279] : memref<1x18x9x8xbf16, #tpu.memory_space<vmem>>, vector<1x1x8x8xbf16>
    %207 = vector.shape_cast %206 : vector<1x1x8x8xbf16> to vector<8x8xbf16>
    %208 = arith.extf %207 : vector<8x8xbf16> to vector<8x8xf32>
    %c8_280 = arith.constant 8 : index
    %c0_281 = arith.constant 0 : index
    %209 = vector.load %arg5[%c8_280, %c0_281] : memref<64x8xf32, #tpu.memory_space<vmem>>, vector<8x8xf32>
    tpu.vector_store %arg5[%c8_280, %c0_281], %208 {strides = array<i32>} : memref<64x8xf32, #tpu.memory_space<vmem>>, vector<8x8xf32>,
    %c0_282 = arith.constant 0 : index
    %c6_283 = arith.constant 6 : index
    %c1_284 = arith.constant 1 : index
    %c0_285 = arith.constant 0 : index
    %210 = vector.load %arg1[%c0_282, %c6_283, %c1_284, %c0_285] : memref<1x18x9x8xbf16, #tpu.memory_space<vmem>>, vector<1x1x8x8xbf16>
    %211 = vector.shape_cast %210 : vector<1x1x8x8xbf16> to vector<8x8xbf16>
    %212 = arith.extf %211 : vector<8x8xbf16> to vector<8x8xf32>
    %c16_286 = arith.constant 16 : index
    %c0_287 = arith.constant 0 : index
    %213 = vector.load %arg5[%c16_286, %c0_287] : memref<64x8xf32, #tpu.memory_space<vmem>>, vector<8x8xf32>
    tpu.vector_store %arg5[%c16_286, %c0_287], %212 {strides = array<i32>} : memref<64x8xf32, #tpu.memory_space<vmem>>, vector<8x8xf32>,
    %c0_288 = arith.constant 0 : index
    %c8_289 = arith.constant 8 : index
    %c1_290 = arith.constant 1 : index
    %c0_291 = arith.constant 0 : index
    %214 = vector.load %arg1[%c0_288, %c8_289, %c1_290, %c0_291] : memref<1x18x9x8xbf16, #tpu.memory_space<vmem>>, vector<1x1x8x8xbf16>
    %215 = vector.shape_cast %214 : vector<1x1x8x8xbf16> to vector<8x8xbf16>
    %216 = arith.extf %215 : vector<8x8xbf16> to vector<8x8xf32>
    %c24_292 = arith.constant 24 : index
    %c0_293 = arith.constant 0 : index
    %217 = vector.load %arg5[%c24_292, %c0_293] : memref<64x8xf32, #tpu.memory_space<vmem>>, vector<8x8xf32>
    tpu.vector_store %arg5[%c24_292, %c0_293], %216 {strides = array<i32>} : memref<64x8xf32, #tpu.memory_space<vmem>>, vector<8x8xf32>,
    %c0_294 = arith.constant 0 : index
    %c10_295 = arith.constant 10 : index
    %c1_296 = arith.constant 1 : index
    %c0_297 = arith.constant 0 : index
    %218 = vector.load %arg1[%c0_294, %c10_295, %c1_296, %c0_297] : memref<1x18x9x8xbf16, #tpu.memory_space<vmem>>, vector<1x1x8x8xbf16>
    %219 = vector.shape_cast %218 : vector<1x1x8x8xbf16> to vector<8x8xbf16>
    %220 = arith.extf %219 : vector<8x8xbf16> to vector<8x8xf32>
    %c32_298 = arith.constant 32 : index
    %c0_299 = arith.constant 0 : index
    %221 = vector.load %arg5[%c32_298, %c0_299] : memref<64x8xf32, #tpu.memory_space<vmem>>, vector<8x8xf32>
    tpu.vector_store %arg5[%c32_298, %c0_299], %220 {strides = array<i32>} : memref<64x8xf32, #tpu.memory_space<vmem>>, vector<8x8xf32>,
    %c0_300 = arith.constant 0 : index
    %c12_301 = arith.constant 12 : index
    %c1_302 = arith.constant 1 : index
    %c0_303 = arith.constant 0 : index
    %222 = vector.load %arg1[%c0_300, %c12_301, %c1_302, %c0_303] : memref<1x18x9x8xbf16, #tpu.memory_space<vmem>>, vector<1x1x8x8xbf16>
    %223 = vector.shape_cast %222 : vector<1x1x8x8xbf16> to vector<8x8xbf16>
    %224 = arith.extf %223 : vector<8x8xbf16> to vector<8x8xf32>
    %c40_304 = arith.constant 40 : index
    %c0_305 = arith.constant 0 : index
    %225 = vector.load %arg5[%c40_304, %c0_305] : memref<64x8xf32, #tpu.memory_space<vmem>>, vector<8x8xf32>
    tpu.vector_store %arg5[%c40_304, %c0_305], %224 {strides = array<i32>} : memref<64x8xf32, #tpu.memory_space<vmem>>, vector<8x8xf32>,
    %c0_306 = arith.constant 0 : index
    %c14_307 = arith.constant 14 : index
    %c1_308 = arith.constant 1 : index
    %c0_309 = arith.constant 0 : index
    %226 = vector.load %arg1[%c0_306, %c14_307, %c1_308, %c0_309] : memref<1x18x9x8xbf16, #tpu.memory_space<vmem>>, vector<1x1x8x8xbf16>
    %227 = vector.shape_cast %226 : vector<1x1x8x8xbf16> to vector<8x8xbf16>
    %228 = arith.extf %227 : vector<8x8xbf16> to vector<8x8xf32>
    %c48_310 = arith.constant 48 : index
    %c0_311 = arith.constant 0 : index
    %229 = vector.load %arg5[%c48_310, %c0_311] : memref<64x8xf32, #tpu.memory_space<vmem>>, vector<8x8xf32>
    tpu.vector_store %arg5[%c48_310, %c0_311], %228 {strides = array<i32>} : memref<64x8xf32, #tpu.memory_space<vmem>>, vector<8x8xf32>,
    %c0_312 = arith.constant 0 : index
    %c16_313 = arith.constant 16 : index
    %c1_314 = arith.constant 1 : index
    %c0_315 = arith.constant 0 : index
    %230 = vector.load %arg1[%c0_312, %c16_313, %c1_314, %c0_315] : memref<1x18x9x8xbf16, #tpu.memory_space<vmem>>, vector<1x1x8x8xbf16>
    %231 = vector.shape_cast %230 : vector<1x1x8x8xbf16> to vector<8x8xbf16>
    %232 = arith.extf %231 : vector<8x8xbf16> to vector<8x8xf32>
    %c56_316 = arith.constant 56 : index
    %c0_317 = arith.constant 0 : index
    %233 = vector.load %arg5[%c56_316, %c0_317] : memref<64x8xf32, #tpu.memory_space<vmem>>, vector<8x8xf32>
    tpu.vector_store %arg5[%c56_316, %c0_317], %232 {strides = array<i32>} : memref<64x8xf32, #tpu.memory_space<vmem>>, vector<8x8xf32>,
    %c0_318 = arith.constant 0 : index
    %c0_319 = arith.constant 0 : index
    %234 = vector.load %arg6[%c0_318, %c0_319] : memref<64x128xf32, #tpu.memory_space<vmem>>, vector<64x128xf32>
    %c0_320 = arith.constant 0 : index
    %c0_321 = arith.constant 0 : index
    %235 = vector.load %arg5[%c0_320, %c0_321] : memref<64x8xf32, #tpu.memory_space<vmem>>, vector<64x8xf32>
    %236 = arith.truncf %235 : vector<64x8xf32> to vector<64x8xbf16>
    %c5_322 = arith.constant 5 : index
    %c0_323 = arith.constant 0 : index
    %c0_324 = arith.constant 0 : index
    %237 = vector.load %arg2[%c5_322, %c0_323, %c0_324] : memref<8x8x128xbf16, #tpu.memory_space<vmem>>, vector<1x8x128xbf16>
    %238 = vector.shape_cast %237 : vector<1x8x128xbf16> to vector<8x128xbf16>
    %cst_325 = arith.constant dense<0.000000e+00> : vector<64x128xf32>
    %239 = tpu.matmul %236, %238, %cst_325 {dimension_numbers = #tpu.dot_dimension_numbers<[1], [0], [0], [1], [0, 0, 1, 1], [], []>} : vector<64x8xbf16>, vector<8x128xbf16>, vector<64x128xf32> -> vector<64x128xf32>
    %240 = arith.addf %234, %239 : vector<64x128xf32>
    %c0_326 = arith.constant 0 : index
    %c0_327 = arith.constant 0 : index
    %241 = vector.load %arg6[%c0_326, %c0_327] : memref<64x128xf32, #tpu.memory_space<vmem>>, vector<64x128xf32>
    tpu.vector_store %arg6[%c0_326, %c0_327], %240 {strides = array<i32>} : memref<64x128xf32, #tpu.memory_space<vmem>>, vector<64x128xf32>,
    %c0_328 = arith.constant 0 : index
    %c3_329 = arith.constant 3 : index
    %c0_330 = arith.constant 0 : index
    %c0_331 = arith.constant 0 : index
    %242 = vector.load %arg1[%c0_328, %c3_329, %c0_330, %c0_331] : memref<1x18x9x8xbf16, #tpu.memory_space<vmem>>, vector<1x1x8x8xbf16>
    %243 = vector.shape_cast %242 : vector<1x1x8x8xbf16> to vector<8x8xbf16>
    %244 = arith.extf %243 : vector<8x8xbf16> to vector<8x8xf32>
    %c0_332 = arith.constant 0 : index
    %c0_333 = arith.constant 0 : index
    %245 = vector.load %arg5[%c0_332, %c0_333] : memref<64x8xf32, #tpu.memory_space<vmem>>, vector<8x8xf32>
    tpu.vector_store %arg5[%c0_332, %c0_333], %244 {strides = array<i32>} : memref<64x8xf32, #tpu.memory_space<vmem>>, vector<8x8xf32>,
    %c0_334 = arith.constant 0 : index
    %c5_335 = arith.constant 5 : index
    %c0_336 = arith.constant 0 : index
    %c0_337 = arith.constant 0 : index
    %246 = vector.load %arg1[%c0_334, %c5_335, %c0_336, %c0_337] : memref<1x18x9x8xbf16, #tpu.memory_space<vmem>>, vector<1x1x8x8xbf16>
    %247 = vector.shape_cast %246 : vector<1x1x8x8xbf16> to vector<8x8xbf16>
    %248 = arith.extf %247 : vector<8x8xbf16> to vector<8x8xf32>
    %c8_338 = arith.constant 8 : index
    %c0_339 = arith.constant 0 : index
    %249 = vector.load %arg5[%c8_338, %c0_339] : memref<64x8xf32, #tpu.memory_space<vmem>>, vector<8x8xf32>
    tpu.vector_store %arg5[%c8_338, %c0_339], %248 {strides = array<i32>} : memref<64x8xf32, #tpu.memory_space<vmem>>, vector<8x8xf32>,
    %c0_340 = arith.constant 0 : index
    %c7_341 = arith.constant 7 : index
    %c0_342 = arith.constant 0 : index
    %c0_343 = arith.constant 0 : index
    %250 = vector.load %arg1[%c0_340, %c7_341, %c0_342, %c0_343] : memref<1x18x9x8xbf16, #tpu.memory_space<vmem>>, vector<1x1x8x8xbf16>
    %251 = vector.shape_cast %250 : vector<1x1x8x8xbf16> to vector<8x8xbf16>
    %252 = arith.extf %251 : vector<8x8xbf16> to vector<8x8xf32>
    %c16_344 = arith.constant 16 : index
    %c0_345 = arith.constant 0 : index
    %253 = vector.load %arg5[%c16_344, %c0_345] : memref<64x8xf32, #tpu.memory_space<vmem>>, vector<8x8xf32>
    tpu.vector_store %arg5[%c16_344, %c0_345], %252 {strides = array<i32>} : memref<64x8xf32, #tpu.memory_space<vmem>>, vector<8x8xf32>,
    %c0_346 = arith.constant 0 : index
    %c9_347 = arith.constant 9 : index
    %c0_348 = arith.constant 0 : index
    %c0_349 = arith.constant 0 : index
    %254 = vector.load %arg1[%c0_346, %c9_347, %c0_348, %c0_349] : memref<1x18x9x8xbf16, #tpu.memory_space<vmem>>, vector<1x1x8x8xbf16>
    %255 = vector.shape_cast %254 : vector<1x1x8x8xbf16> to vector<8x8xbf16>
    %256 = arith.extf %255 : vector<8x8xbf16> to vector<8x8xf32>
    %c24_350 = arith.constant 24 : index
    %c0_351 = arith.constant 0 : index
    %257 = vector.load %arg5[%c24_350, %c0_351] : memref<64x8xf32, #tpu.memory_space<vmem>>, vector<8x8xf32>
    tpu.vector_store %arg5[%c24_350, %c0_351], %256 {strides = array<i32>} : memref<64x8xf32, #tpu.memory_space<vmem>>, vector<8x8xf32>,
    %c0_352 = arith.constant 0 : index
    %c11_353 = arith.constant 11 : index
    %c0_354 = arith.constant 0 : index
    %c0_355 = arith.constant 0 : index
    %258 = vector.load %arg1[%c0_352, %c11_353, %c0_354, %c0_355] : memref<1x18x9x8xbf16, #tpu.memory_space<vmem>>, vector<1x1x8x8xbf16>
    %259 = vector.shape_cast %258 : vector<1x1x8x8xbf16> to vector<8x8xbf16>
    %260 = arith.extf %259 : vector<8x8xbf16> to vector<8x8xf32>
    %c32_356 = arith.constant 32 : index
    %c0_357 = arith.constant 0 : index
    %261 = vector.load %arg5[%c32_356, %c0_357] : memref<64x8xf32, #tpu.memory_space<vmem>>, vector<8x8xf32>
    tpu.vector_store %arg5[%c32_356, %c0_357], %260 {strides = array<i32>} : memref<64x8xf32, #tpu.memory_space<vmem>>, vector<8x8xf32>,
    %c0_358 = arith.constant 0 : index
    %c13_359 = arith.constant 13 : index
    %c0_360 = arith.constant 0 : index
    %c0_361 = arith.constant 0 : index
    %262 = vector.load %arg1[%c0_358, %c13_359, %c0_360, %c0_361] : memref<1x18x9x8xbf16, #tpu.memory_space<vmem>>, vector<1x1x8x8xbf16>
    %263 = vector.shape_cast %262 : vector<1x1x8x8xbf16> to vector<8x8xbf16>
    %264 = arith.extf %263 : vector<8x8xbf16> to vector<8x8xf32>
    %c40_362 = arith.constant 40 : index
    %c0_363 = arith.constant 0 : index
    %265 = vector.load %arg5[%c40_362, %c0_363] : memref<64x8xf32, #tpu.memory_space<vmem>>, vector<8x8xf32>
    tpu.vector_store %arg5[%c40_362, %c0_363], %264 {strides = array<i32>} : memref<64x8xf32, #tpu.memory_space<vmem>>, vector<8x8xf32>,
    %c0_364 = arith.constant 0 : index
    %c15_365 = arith.constant 15 : index
    %c0_366 = arith.constant 0 : index
    %c0_367 = arith.constant 0 : index
    %266 = vector.load %arg1[%c0_364, %c15_365, %c0_366, %c0_367] : memref<1x18x9x8xbf16, #tpu.memory_space<vmem>>, vector<1x1x8x8xbf16>
    %267 = vector.shape_cast %266 : vector<1x1x8x8xbf16> to vector<8x8xbf16>
    %268 = arith.extf %267 : vector<8x8xbf16> to vector<8x8xf32>
    %c48_368 = arith.constant 48 : index
    %c0_369 = arith.constant 0 : index
    %269 = vector.load %arg5[%c48_368, %c0_369] : memref<64x8xf32, #tpu.memory_space<vmem>>, vector<8x8xf32>
    tpu.vector_store %arg5[%c48_368, %c0_369], %268 {strides = array<i32>} : memref<64x8xf32, #tpu.memory_space<vmem>>, vector<8x8xf32>,
    %c0_370 = arith.constant 0 : index
    %c17 = arith.constant 17 : index
    %c0_371 = arith.constant 0 : index
    %c0_372 = arith.constant 0 : index
    %270 = vector.load %arg1[%c0_370, %c17, %c0_371, %c0_372] : memref<1x18x9x8xbf16, #tpu.memory_space<vmem>>, vector<1x1x8x8xbf16>
    %271 = vector.shape_cast %270 : vector<1x1x8x8xbf16> to vector<8x8xbf16>
    %272 = arith.extf %271 : vector<8x8xbf16> to vector<8x8xf32>
    %c56_373 = arith.constant 56 : index
    %c0_374 = arith.constant 0 : index
    %273 = vector.load %arg5[%c56_373, %c0_374] : memref<64x8xf32, #tpu.memory_space<vmem>>, vector<8x8xf32>
    tpu.vector_store %arg5[%c56_373, %c0_374], %272 {strides = array<i32>} : memref<64x8xf32, #tpu.memory_space<vmem>>, vector<8x8xf32>,
    %c0_375 = arith.constant 0 : index
    %c0_376 = arith.constant 0 : index
    %274 = vector.load %arg6[%c0_375, %c0_376] : memref<64x128xf32, #tpu.memory_space<vmem>>, vector<64x128xf32>
    %c0_377 = arith.constant 0 : index
    %c0_378 = arith.constant 0 : index
    %275 = vector.load %arg5[%c0_377, %c0_378] : memref<64x8xf32, #tpu.memory_space<vmem>>, vector<64x8xf32>
    %276 = arith.truncf %275 : vector<64x8xf32> to vector<64x8xbf16>
    %c6_379 = arith.constant 6 : index
    %c0_380 = arith.constant 0 : index
    %c0_381 = arith.constant 0 : index
    %277 = vector.load %arg2[%c6_379, %c0_380, %c0_381] : memref<8x8x128xbf16, #tpu.memory_space<vmem>>, vector<1x8x128xbf16>
    %278 = vector.shape_cast %277 : vector<1x8x128xbf16> to vector<8x128xbf16>
    %cst_382 = arith.constant dense<0.000000e+00> : vector<64x128xf32>
    %279 = tpu.matmul %276, %278, %cst_382 {dimension_numbers = #tpu.dot_dimension_numbers<[1], [0], [0], [1], [0, 0, 1, 1], [], []>} : vector<64x8xbf16>, vector<8x128xbf16>, vector<64x128xf32> -> vector<64x128xf32>
    %280 = arith.addf %274, %279 : vector<64x128xf32>
    %c0_383 = arith.constant 0 : index
    %c0_384 = arith.constant 0 : index
    %281 = vector.load %arg6[%c0_383, %c0_384] : memref<64x128xf32, #tpu.memory_space<vmem>>, vector<64x128xf32>
    tpu.vector_store %arg6[%c0_383, %c0_384], %280 {strides = array<i32>} : memref<64x128xf32, #tpu.memory_space<vmem>>, vector<64x128xf32>,
    %c0_385 = arith.constant 0 : index
    %c3_386 = arith.constant 3 : index
    %c1_387 = arith.constant 1 : index
    %c0_388 = arith.constant 0 : index
    %282 = vector.load %arg1[%c0_385, %c3_386, %c1_387, %c0_388] : memref<1x18x9x8xbf16, #tpu.memory_space<vmem>>, vector<1x1x8x8xbf16>
    %283 = vector.shape_cast %282 : vector<1x1x8x8xbf16> to vector<8x8xbf16>
    %284 = arith.extf %283 : vector<8x8xbf16> to vector<8x8xf32>
    %c0_389 = arith.constant 0 : index
    %c0_390 = arith.constant 0 : index
    %285 = vector.load %arg5[%c0_389, %c0_390] : memref<64x8xf32, #tpu.memory_space<vmem>>, vector<8x8xf32>
    tpu.vector_store %arg5[%c0_389, %c0_390], %284 {strides = array<i32>} : memref<64x8xf32, #tpu.memory_space<vmem>>, vector<8x8xf32>,
    %c0_391 = arith.constant 0 : index
    %c5_392 = arith.constant 5 : index
    %c1_393 = arith.constant 1 : index
    %c0_394 = arith.constant 0 : index
    %286 = vector.load %arg1[%c0_391, %c5_392, %c1_393, %c0_394] : memref<1x18x9x8xbf16, #tpu.memory_space<vmem>>, vector<1x1x8x8xbf16>
    %287 = vector.shape_cast %286 : vector<1x1x8x8xbf16> to vector<8x8xbf16>
    %288 = arith.extf %287 : vector<8x8xbf16> to vector<8x8xf32>
    %c8_395 = arith.constant 8 : index
    %c0_396 = arith.constant 0 : index
    %289 = vector.load %arg5[%c8_395, %c0_396] : memref<64x8xf32, #tpu.memory_space<vmem>>, vector<8x8xf32>
    tpu.vector_store %arg5[%c8_395, %c0_396], %288 {strides = array<i32>} : memref<64x8xf32, #tpu.memory_space<vmem>>, vector<8x8xf32>,
    %c0_397 = arith.constant 0 : index
    %c7_398 = arith.constant 7 : index
    %c1_399 = arith.constant 1 : index
    %c0_400 = arith.constant 0 : index
    %290 = vector.load %arg1[%c0_397, %c7_398, %c1_399, %c0_400] : memref<1x18x9x8xbf16, #tpu.memory_space<vmem>>, vector<1x1x8x8xbf16>
    %291 = vector.shape_cast %290 : vector<1x1x8x8xbf16> to vector<8x8xbf16>
    %292 = arith.extf %291 : vector<8x8xbf16> to vector<8x8xf32>
    %c16_401 = arith.constant 16 : index
    %c0_402 = arith.constant 0 : index
    %293 = vector.load %arg5[%c16_401, %c0_402] : memref<64x8xf32, #tpu.memory_space<vmem>>, vector<8x8xf32>
    tpu.vector_store %arg5[%c16_401, %c0_402], %292 {strides = array<i32>} : memref<64x8xf32, #tpu.memory_space<vmem>>, vector<8x8xf32>,
    %c0_403 = arith.constant 0 : index
    %c9_404 = arith.constant 9 : index
    %c1_405 = arith.constant 1 : index
    %c0_406 = arith.constant 0 : index
    %294 = vector.load %arg1[%c0_403, %c9_404, %c1_405, %c0_406] : memref<1x18x9x8xbf16, #tpu.memory_space<vmem>>, vector<1x1x8x8xbf16>
    %295 = vector.shape_cast %294 : vector<1x1x8x8xbf16> to vector<8x8xbf16>
    %296 = arith.extf %295 : vector<8x8xbf16> to vector<8x8xf32>
    %c24_407 = arith.constant 24 : index
    %c0_408 = arith.constant 0 : index
    %297 = vector.load %arg5[%c24_407, %c0_408] : memref<64x8xf32, #tpu.memory_space<vmem>>, vector<8x8xf32>
    tpu.vector_store %arg5[%c24_407, %c0_408], %296 {strides = array<i32>} : memref<64x8xf32, #tpu.memory_space<vmem>>, vector<8x8xf32>,
    %c0_409 = arith.constant 0 : index
    %c11_410 = arith.constant 11 : index
    %c1_411 = arith.constant 1 : index
    %c0_412 = arith.constant 0 : index
    %298 = vector.load %arg1[%c0_409, %c11_410, %c1_411, %c0_412] : memref<1x18x9x8xbf16, #tpu.memory_space<vmem>>, vector<1x1x8x8xbf16>
    %299 = vector.shape_cast %298 : vector<1x1x8x8xbf16> to vector<8x8xbf16>
    %300 = arith.extf %299 : vector<8x8xbf16> to vector<8x8xf32>
    %c32_413 = arith.constant 32 : index
    %c0_414 = arith.constant 0 : index
    %301 = vector.load %arg5[%c32_413, %c0_414] : memref<64x8xf32, #tpu.memory_space<vmem>>, vector<8x8xf32>
    tpu.vector_store %arg5[%c32_413, %c0_414], %300 {strides = array<i32>} : memref<64x8xf32, #tpu.memory_space<vmem>>, vector<8x8xf32>,
    %c0_415 = arith.constant 0 : index
    %c13_416 = arith.constant 13 : index
    %c1_417 = arith.constant 1 : index
    %c0_418 = arith.constant 0 : index
    %302 = vector.load %arg1[%c0_415, %c13_416, %c1_417, %c0_418] : memref<1x18x9x8xbf16, #tpu.memory_space<vmem>>, vector<1x1x8x8xbf16>
    %303 = vector.shape_cast %302 : vector<1x1x8x8xbf16> to vector<8x8xbf16>
    %304 = arith.extf %303 : vector<8x8xbf16> to vector<8x8xf32>
    %c40_419 = arith.constant 40 : index
    %c0_420 = arith.constant 0 : index
    %305 = vector.load %arg5[%c40_419, %c0_420] : memref<64x8xf32, #tpu.memory_space<vmem>>, vector<8x8xf32>
    tpu.vector_store %arg5[%c40_419, %c0_420], %304 {strides = array<i32>} : memref<64x8xf32, #tpu.memory_space<vmem>>, vector<8x8xf32>,
    %c0_421 = arith.constant 0 : index
    %c15_422 = arith.constant 15 : index
    %c1_423 = arith.constant 1 : index
    %c0_424 = arith.constant 0 : index
    %306 = vector.load %arg1[%c0_421, %c15_422, %c1_423, %c0_424] : memref<1x18x9x8xbf16, #tpu.memory_space<vmem>>, vector<1x1x8x8xbf16>
    %307 = vector.shape_cast %306 : vector<1x1x8x8xbf16> to vector<8x8xbf16>
    %308 = arith.extf %307 : vector<8x8xbf16> to vector<8x8xf32>
    %c48_425 = arith.constant 48 : index
    %c0_426 = arith.constant 0 : index
    %309 = vector.load %arg5[%c48_425, %c0_426] : memref<64x8xf32, #tpu.memory_space<vmem>>, vector<8x8xf32>
    tpu.vector_store %arg5[%c48_425, %c0_426], %308 {strides = array<i32>} : memref<64x8xf32, #tpu.memory_space<vmem>>, vector<8x8xf32>,
    %c0_427 = arith.constant 0 : index
    %c17_428 = arith.constant 17 : index
    %c1_429 = arith.constant 1 : index
    %c0_430 = arith.constant 0 : index
    %310 = vector.load %arg1[%c0_427, %c17_428, %c1_429, %c0_430] : memref<1x18x9x8xbf16, #tpu.memory_space<vmem>>, vector<1x1x8x8xbf16>
    %311 = vector.shape_cast %310 : vector<1x1x8x8xbf16> to vector<8x8xbf16>
    %312 = arith.extf %311 : vector<8x8xbf16> to vector<8x8xf32>
    %c56_431 = arith.constant 56 : index
    %c0_432 = arith.constant 0 : index
    %313 = vector.load %arg5[%c56_431, %c0_432] : memref<64x8xf32, #tpu.memory_space<vmem>>, vector<8x8xf32>
    tpu.vector_store %arg5[%c56_431, %c0_432], %312 {strides = array<i32>} : memref<64x8xf32, #tpu.memory_space<vmem>>, vector<8x8xf32>,
    %c0_433 = arith.constant 0 : index
    %c0_434 = arith.constant 0 : index
    %314 = vector.load %arg6[%c0_433, %c0_434] : memref<64x128xf32, #tpu.memory_space<vmem>>, vector<64x128xf32>
    %c0_435 = arith.constant 0 : index
    %c0_436 = arith.constant 0 : index
    %315 = vector.load %arg5[%c0_435, %c0_436] : memref<64x8xf32, #tpu.memory_space<vmem>>, vector<64x8xf32>
    %316 = arith.truncf %315 : vector<64x8xf32> to vector<64x8xbf16>
    %c7_437 = arith.constant 7 : index
    %c0_438 = arith.constant 0 : index
    %c0_439 = arith.constant 0 : index
    %317 = vector.load %arg2[%c7_437, %c0_438, %c0_439] : memref<8x8x128xbf16, #tpu.memory_space<vmem>>, vector<1x8x128xbf16>
    %318 = vector.shape_cast %317 : vector<1x8x128xbf16> to vector<8x128xbf16>
    %cst_440 = arith.constant dense<0.000000e+00> : vector<64x128xf32>
    %319 = tpu.matmul %316, %318, %cst_440 {dimension_numbers = #tpu.dot_dimension_numbers<[1], [0], [0], [1], [0, 0, 1, 1], [], []>} : vector<64x8xbf16>, vector<8x128xbf16>, vector<64x128xf32> -> vector<64x128xf32>
    %320 = arith.addf %314, %319 : vector<64x128xf32>
    %c0_441 = arith.constant 0 : index
    %c0_442 = arith.constant 0 : index
    %321 = vector.load %arg6[%c0_441, %c0_442] : memref<64x128xf32, #tpu.memory_space<vmem>>, vector<64x128xf32>
    tpu.vector_store %arg6[%c0_441, %c0_442], %320 {strides = array<i32>} : memref<64x128xf32, #tpu.memory_space<vmem>>, vector<64x128xf32>,
    %c0_443 = arith.constant 0 : index
    %c0_444 = arith.constant 0 : index
    %322 = vector.load %arg6[%c0_443, %c0_444] : memref<64x128xf32, #tpu.memory_space<vmem>>, vector<64x128xf32>
    %c0_445 = arith.constant 0 : index
    %c0_446 = arith.constant 0 : index
    %323 = vector.load %arg3[%c0_445, %c0_446] : memref<1x128xf32, #tpu.memory_space<vmem>>, vector<1x128xf32>
    %324 = vector.broadcast %323 : vector<1x128xf32> to vector<64x128xf32>
    %325 = arith.addf %322, %324 : vector<64x128xf32>
    %cst_447 = arith.constant 0.000000e+00 : f32
    %326 = vector.broadcast %cst_447 : f32 to vector<64x128xf32>
    %327 = arith.cmpf ogt, %325, %326 : vector<64x128xf32>
    %cst_448 = arith.constant 2.000000e-01 : f32
    %328 = vector.broadcast %cst_448 : f32 to vector<64x128xf32>
    %329 = arith.mulf %328, %325 : vector<64x128xf32>
    %330 = arith.select %327, %325, %329 : vector<64x128xi1>, vector<64x128xf32>
    %c0_449 = arith.constant 0 : index
    %c0_450 = arith.constant 0 : index
    %c0_451 = arith.constant 0 : index
    %331 = vector.load %arg4[%c0_449, %c0_450, %c0_451] : memref<1x64x128xf32, #tpu.memory_space<vmem>>, vector<1x64x128xf32>
    %332 = vector.shape_cast %331 : vector<1x64x128xf32> to vector<64x128xf32>
    %333 = vector.shape_cast %330 : vector<64x128xf32> to vector<1x64x128xf32>
    tpu.vector_store %arg4[%c0_449, %c0_450, %c0_451], %333 {strides = array<i32>} : memref<1x64x128xf32, #tpu.memory_space<vmem>>, vector<1x64x128xf32>,
    return
  }
  func.func @transform_0(%arg0: i32) -> (i32, i32, i32, i32) {
    %c0_i32 = arith.constant 0 : i32
    %c0_i32_0 = arith.constant 0 : i32
    %c0_i32_1 = arith.constant 0 : i32
    %c0_i32_2 = arith.constant 0 : i32
    return %arg0, %c0_i32, %c0_i32_0, %c0_i32_1 : i32, i32, i32, i32
  }
  func.func @transform_1(%arg0: i32) -> (i32, i32, i32) {
    %c0_i32 = arith.constant 0 : i32
    %c0_i32_0 = arith.constant 0 : i32
    %c0_i32_1 = arith.constant 0 : i32
    %c0_i32_2 = arith.constant 0 : i32
    return %c0_i32, %c0_i32_0, %c0_i32_1 : i32, i32, i32
  }
  func.func @transform_2(%arg0: i32) -> (i32, i32) {
    %c0_i32 = arith.constant 0 : i32
    %c0_i32_0 = arith.constant 0 : i32
    %c0_i32_1 = arith.constant 0 : i32
    return %c0_i32, %c0_i32_0 : i32, i32
  }
  func.func @transform_3(%arg0: i32) -> (i32, i32, i32) {
    %c0_i32 = arith.constant 0 : i32
    %c0_i32_0 = arith.constant 0 : i32
    %c0_i32_1 = arith.constant 0 : i32
    return %arg0, %c0_i32, %c0_i32_0 : i32, i32, i32
  }
}

</mosaic_0001>

<llo_original>
// kernel: unet_compress_forward.1
$region0: #{unet_compress_forward.1}
  #allocation0 [shape = 'u32[]', space=smem, size = 0x4, offset = 0x4, fixed_abs, tag = 'smem constant byte address 0x4 - core index']
  #allocation1 [shape = 'u32[144,128]{1,0:T(1,128)}', space=vmem, size = 0x12000, scoped, tag = 'internal scratch']
  #allocation2 [shape = 'f32[64,8]{1,0:T(8,128)}', space=vmem, size = 0x8000, scoped, tag = 'scratch operand']
  #allocation3 [shape = 'f32[64,128]{1,0:T(8,128)}', space=vmem, size = 0x8000, scoped, tag = 'scratch operand']
  %s0 = inlined_call_operand.vmem [shape: bf16[2,18,9,8], index: 0, kind: input, shape index: {}]
  %s1 = inlined_call_operand.vmem [shape: bf16[8,8,128], index: 1, kind: input, shape index: {}]
  %s2 = inlined_call_operand.vmem [shape: f32[1,128], index: 2, kind: input, shape index: {}]
  %s3 = inlined_call_operand.vmem [shape: f32[2,64,128], index: 3, kind: output, shape index: {}]
  %s4 = sld [smem:[#allocation0]]
  $region45: #{unet_compress_forward.1} parent=0
    _
  %s6 = ssub.s32 1, %s4
  %s7 = scalar_select 0, %s6, %s4
  loop: start=0, step=1, limit=4
  $region2: #{unet_compress_forward.1} parent=0 // loop_pre_header
    _
  $region3: #{unet_compress_forward.1} parent=0 // loop_header
    %s9 = sphi 0, %s13
    %p10 = scmp.ge.s32.totalorder %s9, 4
    %s19 = sphi 0, %s21
    %s22 = sphi 0, %s19
    %s23 = sphi 0, %s22
    %s39 = sphi 0, %s23
    %s43 = sphi 0, %s43
    %s45 = sphi 0, %s43
    %s46 = sphi 0, %s45
    %s60 = sphi 0, %s46
    %s64 = sphi 0, %s64
    %s66 = sphi 0, %s64
    %s67 = sphi 0, %s66
    %s81 = sphi 0, %s67
    %s87 = sphi 0, %s89
    %s90 = sphi 0, %s87
    %s91 = sphi 0, %s90
    %s107 = sphi 0, %s91
  $region4: #{unet_compress_forward.1} parent=0 // loop_header_branch
    %12 = sbr.rel (%p10) target = $region8
  $region5: #{unet_compress_forward.1} parent=0 // loop_body
    %s14 = ssub.s32 %s9, 1
    %s15 = ssub.s32 %s9, 2
    %s16 = sadd.s32 %s9, 1
    %s17 = ssub.s32 %s9, %s16
    %p18 = scmp.eq.s32.totalorder %s17, 0
    %s20 = sadd.s32 %s19, 1
    %s21 = scalar_select %p18, %s19, %s20
    %p24 = pneg %p18
    %p25 = scmp.eq.s32.totalorder %s9, 1
    %p26 = por %p24, %p25
    %p27 = scmp.ne.s32.totalorder %s19, %s22
    %p28 = scmp.eq.s32.totalorder %s9, 0
    %p29 = por %p27, %p28
    %p30 = scmp.ne.s32.totalorder %s19, %s22
    %p31 = scmp.eq.s32.totalorder %s14, 1
    %p32 = por %p30, %p31
    %p33 = scmp.ne.s32.totalorder %s22, %s23
    %p34 = scmp.eq.s32.totalorder %s14, 0
    %p35 = por %p33, %p34
    %p36 = scmp.ne.s32.totalorder %s22, %s23
    %p37 = scmp.eq.s32.totalorder %s15, 1
    %p38 = por %p36, %p37
    %p40 = scmp.ne.s32.totalorder %s23, %s39
    %p41 = scmp.eq.s32.totalorder %s15, 0
    %p42 = por %p40, %p41
    %s44 = sadd.s32 %s43, 1
    %p47 = scmp.eq.s32.totalorder %s9, 1
    %p48 = scmp.ne.s32.totalorder %s43, %s45
    %p49 = scmp.eq.s32.totalorder %s9, 0
    %p50 = por %p48, %p49
    %p51 = scmp.ne.s32.totalorder %s43, %s45
    %p52 = scmp.eq.s32.totalorder %s14, 1
    %p53 = por %p51, %p52
    %p54 = scmp.ne.s32.totalorder %s45, %s46
    %p55 = scmp.eq.s32.totalorder %s14, 0
    %p56 = por %p54, %p55
    %p57 = scmp.ne.s32.totalorder %s45, %s46
    %p58 = scmp.eq.s32.totalorder %s15, 1
    %p59 = por %p57, %p58
    %p61 = scmp.ne.s32.totalorder %s46, %s60
    %p62 = scmp.eq.s32.totalorder %s15, 0
    %p63 = por %p61, %p62
    %s65 = sadd.s32 %s64, 1
    %p68 = scmp.eq.s32.totalorder %s9, 1
    %p69 = scmp.ne.s32.totalorder %s64, %s66
    %p70 = scmp.eq.s32.totalorder %s9, 0
    %p71 = por %p69, %p70
    %p72 = scmp.ne.s32.totalorder %s64, %s66
    %p73 = scmp.eq.s32.totalorder %s14, 1
    %p74 = por %p72, %p73
    %p75 = scmp.ne.s32.totalorder %s66, %s67
    %p76 = scmp.eq.s32.totalorder %s14, 0
    %p77 = por %p75, %p76
    %p78 = scmp.ne.s32.totalorder %s66, %s67
    %p79 = scmp.eq.s32.totalorder %s15, 1
    %p80 = por %p78, %p79
    %p82 = scmp.ne.s32.totalorder %s67, %s81
    %p83 = scmp.eq.s32.totalorder %s15, 0
    %p84 = por %p82, %p83
    %s85 = ssub.s32 %s9, %s16
    %p86 = scmp.eq.s32.totalorder %s85, 0
    %s88 = sadd.s32 %s87, 1
    %s89 = scalar_select %p86, %s87, %s88
    %p92 = pneg %p86
    %p93 = scmp.eq.s32.totalorder %s9, 1
    %p94 = por %p92, %p93
    %p95 = scmp.ne.s32.totalorder %s87, %s90
    %p96 = scmp.eq.s32.totalorder %s9, 0
    %p97 = por %p95, %p96
    %p98 = scmp.ne.s32.totalorder %s87, %s90
    %p99 = scmp.eq.s32.totalorder %s14, 1
    %p100 = por %p98, %p99
    %p101 = scmp.ne.s32.totalorder %s90, %s91
    %p102 = scmp.eq.s32.totalorder %s14, 0
    %p103 = por %p101, %p102
    %p104 = scmp.ne.s32.totalorder %s90, %s91
    %p105 = scmp.eq.s32.totalorder %s15, 1
    %p106 = por %p104, %p105
    %p108 = scmp.ne.s32.totalorder %s91, %s107
    %p109 = scmp.eq.s32.totalorder %s15, 0
    %p110 = por %p108, %p109
    %p111 = scmp.le.s32.totalorder 1, %s9
    %p112 = scmp.lt.s32.totalorder %s9, 3
    %p113 = pnand %p111, %p112
    %p114 = pneg %p113
    // Predicated region
    $region9: #{unet_compress_forward.1} parent=5 // pred_check
      _
    $region10: #{unet_compress_forward.1} parent=5 // pred_check_branch
      %116 = sbr.rel (%p113) target = $region12
    $region11: #{unet_compress_forward.1} parent=5 // pred_region
      %s117 = ssub.s32 %s9, 1
      // Predicated region
      $region13: #{unet_compress_forward.1} parent=11 // pred_check
        %p118 = pneg %p56
      $region14: #{unet_compress_forward.1} parent=11 // pred_check_branch
        %120 = sbr.rel (%p118) target = $region16
      $region15: #{unet_compress_forward.1} parent=11 // pred_region
        _
      $region16: #{unet_compress_forward.1} parent=11 // pred_fallthru
        _
      // Predicated region
      $region17: #{unet_compress_forward.1} parent=11 // pred_check
        %p121 = pneg %p77
      $region18: #{unet_compress_forward.1} parent=11 // pred_check_branch
        %123 = sbr.rel (%p121) target = $region20
      $region19: #{unet_compress_forward.1} parent=11 // pred_region
        _
      $region20: #{unet_compress_forward.1} parent=11 // pred_fallthru
        _
    $region12: #{unet_compress_forward.1} parent=5 // pred_fallthru
      _
    %p124 = scmp.lt.s32.totalorder %s9, 2
    // Predicated region
    $region21: #{unet_compress_forward.1} parent=5 // pred_check
      %p125 = pneg %p124
    $region22: #{unet_compress_forward.1} parent=5 // pred_check_branch
      %127 = sbr.rel (%p125) target = $region24
    $region23: #{unet_compress_forward.1} parent=5 // pred_region
      // Predicated region
      $region25: #{unet_compress_forward.1} parent=23 // pred_check
        %p128 = pneg %p29
      $region26: #{unet_compress_forward.1} parent=23 // pred_check_branch
        %130 = sbr.rel (%p128) target = $region28
      $region27: #{unet_compress_forward.1} parent=23 // pred_region
        %p131 = scmp.lt.s32.totalorder %s9, 1
        %s132 = scalar_select %p131, %s9, 1
        %s133 = smul.addr %s132, 36
        %s134 = smul.addr %s133, 4
        %s135 = scalar_lea.vmem %s0, %s134
      $region28: #{unet_compress_forward.1} parent=23 // pred_fallthru
        _
    $region24: #{unet_compress_forward.1} parent=5 // pred_fallthru
      _
    %p136 = scmp.le.s32.totalorder 1, %s9
    %p137 = scmp.lt.s32.totalorder %s9, 3
    %p138 = pnand %p136, %p137
    %p139 = pneg %p138
    // Predicated region
    $region29: #{unet_compress_forward.1} parent=5 // pred_check
      _
    $region30: #{unet_compress_forward.1} parent=5 // pred_check_branch
      %141 = sbr.rel (%p138) target = $region32
    $region31: #{unet_compress_forward.1} parent=5 // pred_region
      %s142 = ssub.s32 %s9, 1
      %p143 = scmp.lt.s32.totalorder %s14, 1
      %s144 = scalar_select %p143, %s14, 1
      %s145 = smul.addr %s144, 36
      %s146 = smul.addr %s145, 4
      %s147 = scalar_lea.vmem %s0, %s146
      %p148 = pneg %p35
      %p149 = pneg %p32
      %p150 = pneg %p56
      %p151 = pneg %p53
      %p152 = pneg %p77
      %p153 = pneg %p74
      %p154 = pneg %p103
      %p155 = pneg %p100
      %p156 = scmp.lt.s32.totalorder %s14, 1
      %s157 = scalar_select %p156, %s14, 1
      %s158 = smul.addr %s157, 8
      %s159 = smul.addr %s158, 8
      %s160 = scalar_lea.vmem %s3, %s159
      %p161 = scmp.lt.s32.totalorder %s14, 1
      %s162 = scalar_select %p161, %s14, 1
      %s163 = smul.addr %s162, 36
      %s164 = smul.addr %s163, 4
      %s165 = scalar_lea.vmem %s0, %s164
      %p166 = scmp.lt.s32.totalorder %s14, 1
      %s167 = scalar_select %p166, %s14, 1
      %s168 = smul.addr %s167, 8
      %s169 = smul.addr %s168, 8
      %s170 = scalar_lea.vmem %s3, %s169
      %172 = vst [vmem:[#allocation3] sm:$0xff] 0.0
      %173 = vst [vmem:[#allocation3 + $0x8] sm:$0xff] 0.0
      %174 = vst [vmem:[#allocation3 + $0x10] sm:$0xff] 0.0
      %175 = vst [vmem:[#allocation3 + $0x18] sm:$0xff] 0.0
      %176 = vst [vmem:[#allocation3 + $0x20] sm:$0xff] 0.0
      %177 = vst [vmem:[#allocation3 + $0x28] sm:$0xff] 0.0
      %178 = vst [vmem:[#allocation3 + $0x30] sm:$0xff] 0.0
      %179 = vst [vmem:[#allocation3 + $0x38] sm:$0xff] 0.0
      %v180 = vld [vmem:[%s165] sm:$0xf]
      %v181 = vunpack.c.l.bf16 %v180
      %vm182 = vcmask 64512
      %183 = vst.msk [vmem:[#allocation2] sm:$0xff] %vm182, %v181
      %s184 = scalar_lea.vmem %s165, 16
      %v185 = vld [vmem:[%s184] sm:$0xf]
      %v186 = vunpack.c.l.bf16 %v185
      %187 = vst.msk [vmem:[#allocation2 + $0x8] sm:$0xff] %vm182, %v186
      %s188 = scalar_lea.vmem %s165, 32
      %v189 = vld [vmem:[%s188] sm:$0xf]
      %v190 = vunpack.c.l.bf16 %v189
      %191 = vst.msk [vmem:[#allocation2 + $0x10] sm:$0xff] %vm182, %v190
      %s192 = scalar_lea.vmem %s165, 48
      %v193 = vld [vmem:[%s192] sm:$0xf]
      %v194 = vunpack.c.l.bf16 %v193
      %195 = vst.msk [vmem:[#allocation2 + $0x18] sm:$0xff] %vm182, %v194
      %s196 = scalar_lea.vmem %s165, 64
      %v197 = vld [vmem:[%s196] sm:$0xf]
      %v198 = vunpack.c.l.bf16 %v197
      %199 = vst.msk [vmem:[#allocation2 + $0x20] sm:$0xff] %vm182, %v198
      %s200 = scalar_lea.vmem %s165, 80
      %v201 = vld [vmem:[%s200] sm:$0xf]
      %v202 = vunpack.c.l.bf16 %v201
      %203 = vst.msk [vmem:[#allocation2 + $0x28] sm:$0xff] %vm182, %v202
      %s204 = scalar_lea.vmem %s165, 96
      %v205 = vld [vmem:[%s204] sm:$0xf]
      %v206 = vunpack.c.l.bf16 %v205
      %207 = vst.msk [vmem:[#allocation2 + $0x30] sm:$0xff] %vm182, %v206
      %s208 = scalar_lea.vmem %s165, 112
      %v209 = vld [vmem:[%s208] sm:$0xf]
      %v210 = vunpack.c.l.bf16 %v209
      %211 = vst.msk [vmem:[#allocation2 + $0x38] sm:$0xff] %vm182, %v210
      %v212 = vld [vmem:[#allocation3] sm:$0xff]
      %v213 = vld [vmem:[#allocation3 + $0x8] sm:$0xff]
      %v214 = vld [vmem:[#allocation3 + $0x10] sm:$0xff]
      %v215 = vld [vmem:[#allocation3 + $0x18] sm:$0xff]
      %v216 = vld [vmem:[#allocation3 + $0x20] sm:$0xff]
      %v217 = vld [vmem:[#allocation3 + $0x28] sm:$0xff]
      %v218 = vld [vmem:[#allocation3 + $0x30] sm:$0xff]
      %v219 = vld [vmem:[#allocation3 + $0x38] sm:$0xff]
      %v220 = vld [vmem:[#allocation2] sm:$0xff]
      %v221 = vld [vmem:[#allocation2 + $0x8] sm:$0xff]
      %v222 = vld [vmem:[#allocation2 + $0x10] sm:$0xff]
      %v223 = vld [vmem:[#allocation2 + $0x18] sm:$0xff]
      %v224 = vld [vmem:[#allocation2 + $0x20] sm:$0xff]
      %v225 = vld [vmem:[#allocation2 + $0x28] sm:$0xff]
      %v226 = vld [vmem:[#allocation2 + $0x30] sm:$0xff]
      %v227 = vld [vmem:[#allocation2 + $0x38] sm:$0xff]
      %v228 = vpack.c.bf16 %v221, %v220
      %v229 = vpack.c.bf16 %v223, %v222
      %v230 = vpack.c.bf16 %v225, %v224
      %v231 = vpack.c.bf16 %v227, %v226
      %v232 = vld [vmem:[%s1] sm:$0xf]
      %v234 = vsel %vm182, %v228, 0
      %v237 = vsel %vm182, %v229, 0
      %v240 = vsel %vm182, %v230, 0
      %v243 = vsel %vm182, %v231, 0
      %vm245 = vcmask 1043456
      %v247 = vsel %vm245, %v232, 0
      %249 = vmatprep.subr.bf16.mxu0 0
      %250 = vmatpush1.bf16.msra.mxu0 0
      %251 = vmatprep.subr.bf16.mxu0 0
      %252 = vmatpush1.bf16.msra.mxu0 0
      %253 = vmatprep.subr.bf16.mxu0 0
      %254 = vmatpush1.bf16.msra.mxu0 0
      %255 = vmatprep.subr.bf16.mxu0 0
      %256 = vmatpush1.bf16.msra.mxu0 0
      %257 = vmatprep.subr.bf16.mxu0 0
      %258 = vmatpush1.bf16.msra.mxu0 0
      %259 = vmatprep.subr.bf16.mxu0 0
      %260 = vmatpush1.bf16.msra.mxu0 0
      %261 = vmatprep.subr.bf16.mxu0 0
      %262 = vmatpush1.bf16.msra.mxu0 0
      %263 = vmatprep.subr.bf16.mxu0 0
      %264 = vmatpush1.bf16.msra.mxu0 %v247
      %265 = vmatprep.subr.bf16.mxu0 0
      %266 = vmatpush2.bf16.msra.mxu0 0
      %267 = vmatprep.subr.bf16.mxu0 0
      %268 = vmatpush2.bf16.msra.mxu0 0
      %269 = vmatprep.subr.bf16.mxu0 0
      %270 = vmatpush2.bf16.msra.mxu0 0
      %271 = vmatprep.subr.bf16.mxu0 0
      %272 = vmatpush2.bf16.msra.mxu0 0
      %273 = vmatprep.subr.bf16.mxu0 0
      %274 = vmatpush2.bf16.msra.mxu0 0
      %275 = vmatprep.subr.bf16.mxu0 0
      %276 = vmatpush2.bf16.msra.mxu0 0
      %277 = vmatprep.subr.bf16.mxu0 0
      %278 = vmatpush2.bf16.msra.mxu0 0
      %279 = vmatprep.subr.bf16.mxu0 0
      %280 = vmatpush2.bf16.msra.mxu0 0
      %281 = vmatprep.mubr.bf16.mxu0 0
      %282 = vmatmul.mubr.bf16.gmra.mxu0 %v234
      %v283 = vpop.f32.mrf.mxu0
      %v284 = vadd.f32 0.0, %v283
      %v285 = vpop.f32.mrf.mxu0
      %v286 = vpop.f32.mrf.mxu0
      %v287 = vadd.f32 0.0, %v286
      %v288 = vpop.f32.mrf.mxu0
      %289 = vmatprep.mubr.bf16.mxu0 0
      %290 = vmatmul.mubr.bf16.gmra.mxu0 %v237
      %v291 = vpop.f32.mrf.mxu0
      %v292 = vadd.f32 0.0, %v291
      %v293 = vpop.f32.mrf.mxu0
      %v294 = vpop.f32.mrf.mxu0
      %v295 = vadd.f32 0.0, %v294
      %v296 = vpop.f32.mrf.mxu0
      %297 = vmatprep.mubr.bf16.mxu0 0
      %298 = vmatmul.mubr.bf16.gmra.mxu0 %v240
      %v299 = vpop.f32.mrf.mxu0
      %v300 = vadd.f32 0.0, %v299
      %v301 = vpop.f32.mrf.mxu0
      %v302 = vpop.f32.mrf.mxu0
      %v303 = vadd.f32 0.0, %v302
      %v304 = vpop.f32.mrf.mxu0
      %305 = vmatprep.mubr.bf16.mxu0 0
      %306 = vmatmul.mubr.bf16.gmra.mxu0 %v243
      %v307 = vpop.f32.mrf.mxu0
      %v308 = vadd.f32 0.0, %v307
      %v309 = vpop.f32.mrf.mxu0
      %v310 = vpop.f32.mrf.mxu0
      %v311 = vadd.f32 0.0, %v310
      %v312 = vpop.f32.mrf.mxu0
      %313 = vdwg.mxu0
      %v314 = vadd.f32 %v212, %v284
      %v315 = vadd.f32 %v213, %v287
      %v316 = vadd.f32 %v214, %v292
      %v317 = vadd.f32 %v215, %v295
      %v318 = vadd.f32 %v216, %v300
      %v319 = vadd.f32 %v217, %v303
      %v320 = vadd.f32 %v218, %v308
      %v321 = vadd.f32 %v219, %v311
      %322 = vst [vmem:[#allocation3] sm:$0xff] %v314
      %323 = vst [vmem:[#allocation3 + $0x8] sm:$0xff] %v315
      %324 = vst [vmem:[#allocation3 + $0x10] sm:$0xff] %v316
      %325 = vst [vmem:[#allocation3 + $0x18] sm:$0xff] %v317
      %326 = vst [vmem:[#allocation3 + $0x20] sm:$0xff] %v318
      %327 = vst [vmem:[#allocation3 + $0x28] sm:$0xff] %v319
      %328 = vst [vmem:[#allocation3 + $0x30] sm:$0xff] %v320
      %329 = vst [vmem:[#allocation3 + $0x38] sm:$0xff] %v321
      %v330 = vld [vmem:[%s165] sm:$0xf]
      %v331 = vld [vmem:[%s165 + $0x4] sm:$0x1]
      %v332 = vunpack.c.l.bf16 %v330
      %v333 = vunpack.c.l.bf16 %v331
      %vm334 = vcmask 64513
      %335 = vst.msk [vmem:[#allocation2 - $0x1] sm:$0xfe] %vm334, %v332
      %vm336 = vcmask 57344
      %337 = vst.msk [vmem:[#allocation2 + $0x7] sm:$0x1] %vm336, %v333
      %v338 = vld [vmem:[%s184] sm:$0xf]
      %v339 = vld [vmem:[%s184 + $0x4] sm:$0x1]
      %v340 = vunpack.c.l.bf16 %v338
      %v341 = vunpack.c.l.bf16 %v339
      %342 = vst.msk [vmem:[#allocation2 + $0x7] sm:$0xfe] %vm334, %v340
      %343 = vst.msk [vmem:[#allocation2 + $0xf] sm:$0x1] %vm336, %v341
      %v344 = vld [vmem:[%s188] sm:$0xf]
      %v345 = vld [vmem:[%s188 + $0x4] sm:$0x1]
      %v346 = vunpack.c.l.bf16 %v344
      %v347 = vunpack.c.l.bf16 %v345
      %348 = vst.msk [vmem:[#allocation2 + $0xf] sm:$0xfe] %vm334, %v346
      %349 = vst.msk [vmem:[#allocation2 + $0x17] sm:$0x1] %vm336, %v347
      %v350 = vld [vmem:[%s192] sm:$0xf]
      %v351 = vld [vmem:[%s192 + $0x4] sm:$0x1]
      %v352 = vunpack.c.l.bf16 %v350
      %v353 = vunpack.c.l.bf16 %v351
      %354 = vst.msk [vmem:[#allocation2 + $0x17] sm:$0xfe] %vm334, %v352
      %355 = vst.msk [vmem:[#allocation2 + $0x1f] sm:$0x1] %vm336, %v353
      %v356 = vld [vmem:[%s196] sm:$0xf]
      %v357 = vld [vmem:[%s196 + $0x4] sm:$0x1]
      %v358 = vunpack.c.l.bf16 %v356
      %v359 = vunpack.c.l.bf16 %v357
      %360 = vst.msk [vmem:[#allocation2 + $0x1f] sm:$0xfe] %vm334, %v358
      %361 = vst.msk [vmem:[#allocation2 + $0x27] sm:$0x1] %vm336, %v359
      %v362 = vld [vmem:[%s200] sm:$0xf]
      %v363 = vld [vmem:[%s200 + $0x4] sm:$0x1]
      %v364 = vunpack.c.l.bf16 %v362
      %v365 = vunpack.c.l.bf16 %v363
      %366 = vst.msk [vmem:[#allocation2 + $0x27] sm:$0xfe] %vm334, %v364
      %367 = vst.msk [vmem:[#allocation2 + $0x2f] sm:$0x1] %vm336, %v365
      %v368 = vld [vmem:[%s204] sm:$0xf]
      %v369 = vld [vmem:[%s204 + $0x4] sm:$0x1]
      %v370 = vunpack.c.l.bf16 %v368
      %v371 = vunpack.c.l.bf16 %v369
      %372 = vst.msk [vmem:[#allocation2 + $0x2f] sm:$0xfe] %vm334, %v370
      %373 = vst.msk [vmem:[#allocation2 + $0x37] sm:$0x1] %vm336, %v371
      %v374 = vld [vmem:[%s208] sm:$0xf]
      %v375 = vld [vmem:[%s208 + $0x4] sm:$0x1]
      %v376 = vunpack.c.l.bf16 %v374
      %v377 = vunpack.c.l.bf16 %v375
      %378 = vst.msk [vmem:[#allocation2 + $0x37] sm:$0xfe] %vm334, %v376
      %379 = vst.msk [vmem:[#allocation2 + $0x3f] sm:$0x1] %vm336, %v377
      %v380 = vld [vmem:[#allocation3] sm:$0xff]
      %v381 = vld [vmem:[#allocation3 + $0x8] sm:$0xff]
      %v382 = vld [vmem:[#allocation3 + $0x10] sm:$0xff]
      %v383 = vld [vmem:[#allocation3 + $0x18] sm:$0xff]
      %v384 = vld [vmem:[#allocation3 + $0x20] sm:$0xff]
      %v385 = vld [vmem:[#allocation3 + $0x28] sm:$0xff]
      %v386 = vld [vmem:[#allocation3 + $0x30] sm:$0xff]
      %v387 = vld [vmem:[#allocation3 + $0x38] sm:$0xff]
      %v388 = vld [vmem:[#allocation2] sm:$0xff]
      %v389 = vld [vmem:[#allocation2 + $0x8] sm:$0xff]
      %v390 = vld [vmem:[#allocation2 + $0x10] sm:$0xff]
      %v391 = vld [vmem:[#allocation2 + $0x18] sm:$0xff]
      %v392 = vld [vmem:[#allocation2 + $0x20] sm:$0xff]
      %v393 = vld [vmem:[#allocation2 + $0x28] sm:$0xff]
      %v394 = vld [vmem:[#allocation2 + $0x30] sm:$0xff]
      %v395 = vld [vmem:[#allocation2 + $0x38] sm:$0xff]
      %v396 = vpack.c.bf16 %v389, %v388
      %v397 = vpack.c.bf16 %v391, %v390
      %v398 = vpack.c.bf16 %v393, %v392
      %v399 = vpack.c.bf16 %v395, %v394
      %s400 = scalar_lea.vmem %s1, 4
      %v401 = vld [vmem:[%s400] sm:$0xf]
      %v403 = vsel %vm182, %v396, 0
      %v406 = vsel %vm182, %v397, 0
      %v409 = vsel %vm182, %v398, 0
      %v412 = vsel %vm182, %v399, 0
      %v415 = vsel %vm245, %v401, 0
      %417 = vmatprep.subr.bf16.mxu0 0
      %418 = vmatpush1.bf16.msra.mxu0 0
      %419 = vmatprep.subr.bf16.mxu0 0
      %420 = vmatpush1.bf16.msra.mxu0 0
      %421 = vmatprep.subr.bf16.mxu0 0
      %422 = vmatpush1.bf16.msra.mxu0 0
      %423 = vmatprep.subr.bf16.mxu0 0
      %424 = vmatpush1.bf16.msra.mxu0 0
      %425 = vmatprep.subr.bf16.mxu0 0
      %426 = vmatpush1.bf16.msra.mxu0 0
      %427 = vmatprep.subr.bf16.mxu0 0
      %428 = vmatpush1.bf16.msra.mxu0 0
      %429 = vmatprep.subr.bf16.mxu0 0
      %430 = vmatpush1.bf16.msra.mxu0 0
      %431 = vmatprep.subr.bf16.mxu0 0
      %432 = vmatpush1.bf16.msra.mxu0 %v415
      %433 = vmatprep.subr.bf16.mxu0 0
      %434 = vmatpush2.bf16.msra.mxu0 0
      %435 = vmatprep.subr.bf16.mxu0 0
      %436 = vmatpush2.bf16.msra.mxu0 0
      %437 = vmatprep.subr.bf16.mxu0 0
      %438 = vmatpush2.bf16.msra.mxu0 0
      %439 = vmatprep.subr.bf16.mxu0 0
      %440 = vmatpush2.bf16.msra.mxu0 0
      %441 = vmatprep.subr.bf16.mxu0 0
      %442 = vmatpush2.bf16.msra.mxu0 0
      %443 = vmatprep.subr.bf16.mxu0 0
      %444 = vmatpush2.bf16.msra.mxu0 0
      %445 = vmatprep.subr.bf16.mxu0 0
      %446 = vmatpush2.bf16.msra.mxu0 0
      %447 = vmatprep.subr.bf16.mxu0 0
      %448 = vmatpush2.bf16.msra.mxu0 0
      %449 = vmatprep.mubr.bf16.mxu0 0
      %450 = vmatmul.mubr.bf16.gmra.mxu0 %v403
      %v451 = vpop.f32.mrf.mxu0
      %v452 = vadd.f32 0.0, %v451
      %v453 = vpop.f32.mrf.mxu0
      %v454 = vpop.f32.mrf.mxu0
      %v455 = vadd.f32 0.0, %v454
      %v456 = vpop.f32.mrf.mxu0
      %457 = vmatprep.mubr.bf16.mxu0 0
      %458 = vmatmul.mubr.bf16.gmra.mxu0 %v406
      %v459 = vpop.f32.mrf.mxu0
      %v460 = vadd.f32 0.0, %v459
      %v461 = vpop.f32.mrf.mxu0
      %v462 = vpop.f32.mrf.mxu0
      %v463 = vadd.f32 0.0, %v462
      %v464 = vpop.f32.mrf.mxu0
      %465 = vmatprep.mubr.bf16.mxu0 0
      %466 = vmatmul.mubr.bf16.gmra.mxu0 %v409
      %v467 = vpop.f32.mrf.mxu0
      %v468 = vadd.f32 0.0, %v467
      %v469 = vpop.f32.mrf.mxu0
      %v470 = vpop.f32.mrf.mxu0
      %v471 = vadd.f32 0.0, %v470
      %v472 = vpop.f32.mrf.mxu0
      %473 = vmatprep.mubr.bf16.mxu0 0
      %474 = vmatmul.mubr.bf16.gmra.mxu0 %v412
      %v475 = vpop.f32.mrf.mxu0
      %v476 = vadd.f32 0.0, %v475
      %v477 = vpop.f32.mrf.mxu0
      %v478 = vpop.f32.mrf.mxu0
      %v479 = vadd.f32 0.0, %v478
      %v480 = vpop.f32.mrf.mxu0
      %481 = vdwg.mxu0
      %v482 = vadd.f32 %v380, %v452
      %v483 = vadd.f32 %v381, %v455
      %v484 = vadd.f32 %v382, %v460
      %v485 = vadd.f32 %v383, %v463
      %v486 = vadd.f32 %v384, %v468
      %v487 = vadd.f32 %v385, %v471
      %v488 = vadd.f32 %v386, %v476
      %v489 = vadd.f32 %v387, %v479
      %490 = vst [vmem:[#allocation3] sm:$0xff] %v482
      %491 = vst [vmem:[#allocation3 + $0x8] sm:$0xff] %v483
      %492 = vst [vmem:[#allocation3 + $0x10] sm:$0xff] %v484
      %493 = vst [vmem:[#allocation3 + $0x18] sm:$0xff] %v485
      %494 = vst [vmem:[#allocation3 + $0x20] sm:$0xff] %v486
      %495 = vst [vmem:[#allocation3 + $0x28] sm:$0xff] %v487
      %496 = vst [vmem:[#allocation3 + $0x30] sm:$0xff] %v488
      %497 = vst [vmem:[#allocation3 + $0x38] sm:$0xff] %v489
      %s498 = scalar_lea.vmem %s165, 8
      %v499 = vld [vmem:[%s498] sm:$0xf]
      %v500 = vunpack.c.l.bf16 %v499
      %501 = vst.msk [vmem:[#allocation2] sm:$0xff] %vm182, %v500
      %s502 = scalar_lea.vmem %s165, 24
      %v503 = vld [vmem:[%s502] sm:$0xf]
      %v504 = vunpack.c.l.bf16 %v503
      %505 = vst.msk [vmem:[#allocation2 + $0x8] sm:$0xff] %vm182, %v504
      %s506 = scalar_lea.vmem %s165, 40
      %v507 = vld [vmem:[%s506] sm:$0xf]
      %v508 = vunpack.c.l.bf16 %v507
      %509 = vst.msk [vmem:[#allocation2 + $0x10] sm:$0xff] %vm182, %v508
      %s510 = scalar_lea.vmem %s165, 56
      %v511 = vld [vmem:[%s510] sm:$0xf]
      %v512 = vunpack.c.l.bf16 %v511
      %513 = vst.msk [vmem:[#allocation2 + $0x18] sm:$0xff] %vm182, %v512
      %s514 = scalar_lea.vmem %s165, 72
      %v515 = vld [vmem:[%s514] sm:$0xf]
      %v516 = vunpack.c.l.bf16 %v515
      %517 = vst.msk [vmem:[#allocation2 + $0x20] sm:$0xff] %vm182, %v516
      %s518 = scalar_lea.vmem %s165, 88
      %v519 = vld [vmem:[%s518] sm:$0xf]
      %v520 = vunpack.c.l.bf16 %v519
      %521 = vst.msk [vmem:[#allocation2 + $0x28] sm:$0xff] %vm182, %v520
      %s522 = scalar_lea.vmem %s165, 104
      %v523 = vld [vmem:[%s522] sm:$0xf]
      %v524 = vunpack.c.l.bf16 %v523
      %525 = vst.msk [vmem:[#allocation2 + $0x30] sm:$0xff] %vm182, %v524
      %s526 = scalar_lea.vmem %s165, 120
      %v527 = vld [vmem:[%s526] sm:$0xf]
      %v528 = vunpack.c.l.bf16 %v527
      %529 = vst.msk [vmem:[#allocation2 + $0x38] sm:$0xff] %vm182, %v528
      %v530 = vld [vmem:[#allocation3] sm:$0xff]
      %v531 = vld [vmem:[#allocation3 + $0x8] sm:$0xff]
      %v532 = vld [vmem:[#allocation3 + $0x10] sm:$0xff]
      %v533 = vld [vmem:[#allocation3 + $0x18] sm:$0xff]
      %v534 = vld [vmem:[#allocation3 + $0x20] sm:$0xff]
      %v535 = vld [vmem:[#allocation3 + $0x28] sm:$0xff]
      %v536 = vld [vmem:[#allocation3 + $0x30] sm:$0xff]
      %v537 = vld [vmem:[#allocation3 + $0x38] sm:$0xff]
      %v538 = vld [vmem:[#allocation2] sm:$0xff]
      %v539 = vld [vmem:[#allocation2 + $0x8] sm:$0xff]
      %v540 = vld [vmem:[#allocation2 + $0x10] sm:$0xff]
      %v541 = vld [vmem:[#allocation2 + $0x18] sm:$0xff]
      %v542 = vld [vmem:[#allocation2 + $0x20] sm:$0xff]
      %v543 = vld [vmem:[#allocation2 + $0x28] sm:$0xff]
      %v544 = vld [vmem:[#allocation2 + $0x30] sm:$0xff]
      %v545 = vld [vmem:[#allocation2 + $0x38] sm:$0xff]
      %v546 = vpack.c.bf16 %v539, %v538
      %v547 = vpack.c.bf16 %v541, %v540
      %v548 = vpack.c.bf16 %v543, %v542
      %v549 = vpack.c.bf16 %v545, %v544
      %s550 = scalar_lea.vmem %s1, 8
      %v551 = vld [vmem:[%s550] sm:$0xf]
      %v553 = vsel %vm182, %v546, 0
      %v556 = vsel %vm182, %v547, 0
      %v559 = vsel %vm182, %v548, 0
      %v562 = vsel %vm182, %v549, 0
      %v565 = vsel %vm245, %v551, 0
      %567 = vmatprep.subr.bf16.mxu0 0
      %568 = vmatpush1.bf16.msra.mxu0 0
      %569 = vmatprep.subr.bf16.mxu0 0
      %570 = vmatpush1.bf16.msra.mxu0 0
      %571 = vmatprep.subr.bf16.mxu0 0
      %572 = vmatpush1.bf16.msra.mxu0 0
      %573 = vmatprep.subr.bf16.mxu0 0
      %574 = vmatpush1.bf16.msra.mxu0 0
      %575 = vmatprep.subr.bf16.mxu0 0
      %576 = vmatpush1.bf16.msra.mxu0 0
      %577 = vmatprep.subr.bf16.mxu0 0
      %578 = vmatpush1.bf16.msra.mxu0 0
      %579 = vmatprep.subr.bf16.mxu0 0
      %580 = vmatpush1.bf16.msra.mxu0 0
      %581 = vmatprep.subr.bf16.mxu0 0
      %582 = vmatpush1.bf16.msra.mxu0 %v565
      %583 = vmatprep.subr.bf16.mxu0 0
      %584 = vmatpush2.bf16.msra.mxu0 0
      %585 = vmatprep.subr.bf16.mxu0 0
      %586 = vmatpush2.bf16.msra.mxu0 0
      %587 = vmatprep.subr.bf16.mxu0 0
      %588 = vmatpush2.bf16.msra.mxu0 0
      %589 = vmatprep.subr.bf16.mxu0 0
      %590 = vmatpush2.bf16.msra.mxu0 0
      %591 = vmatprep.subr.bf16.mxu0 0
      %592 = vmatpush2.bf16.msra.mxu0 0
      %593 = vmatprep.subr.bf16.mxu0 0
      %594 = vmatpush2.bf16.msra.mxu0 0
      %595 = vmatprep.subr.bf16.mxu0 0
      %596 = vmatpush2.bf16.msra.mxu0 0
      %597 = vmatprep.subr.bf16.mxu0 0
      %598 = vmatpush2.bf16.msra.mxu0 0
      %599 = vmatprep.mubr.bf16.mxu0 0
      %600 = vmatmul.mubr.bf16.gmra.mxu0 %v553
      %v601 = vpop.f32.mrf.mxu0
      %v602 = vadd.f32 0.0, %v601
      %v603 = vpop.f32.mrf.mxu0
      %v604 = vpop.f32.mrf.mxu0
      %v605 = vadd.f32 0.0, %v604
      %v606 = vpop.f32.mrf.mxu0
      %607 = vmatprep.mubr.bf16.mxu0 0
      %608 = vmatmul.mubr.bf16.gmra.mxu0 %v556
      %v609 = vpop.f32.mrf.mxu0
      %v610 = vadd.f32 0.0, %v609
      %v611 = vpop.f32.mrf.mxu0
      %v612 = vpop.f32.mrf.mxu0
      %v613 = vadd.f32 0.0, %v612
      %v614 = vpop.f32.mrf.mxu0
      %615 = vmatprep.mubr.bf16.mxu0 0
      %616 = vmatmul.mubr.bf16.gmra.mxu0 %v559
      %v617 = vpop.f32.mrf.mxu0
      %v618 = vadd.f32 0.0, %v617
      %v619 = vpop.f32.mrf.mxu0
      %v620 = vpop.f32.mrf.mxu0
      %v621 = vadd.f32 0.0, %v620
      %v622 = vpop.f32.mrf.mxu0
      %623 = vmatprep.mubr.bf16.mxu0 0
      %624 = vmatmul.mubr.bf16.gmra.mxu0 %v562
      %v625 = vpop.f32.mrf.mxu0
      %v626 = vadd.f32 0.0, %v625
      %v627 = vpop.f32.mrf.mxu0
      %v628 = vpop.f32.mrf.mxu0
      %v629 = vadd.f32 0.0, %v628
      %v630 = vpop.f32.mrf.mxu0
      %631 = vdwg.mxu0
      %v632 = vadd.f32 %v530, %v602
      %v633 = vadd.f32 %v531, %v605
      %v634 = vadd.f32 %v532, %v610
      %v635 = vadd.f32 %v533, %v613
      %v636 = vadd.f32 %v534, %v618
      %v637 = vadd.f32 %v535, %v621
      %v638 = vadd.f32 %v536, %v626
      %v639 = vadd.f32 %v537, %v629
      %640 = vst [vmem:[#allocation3] sm:$0xff] %v632
      %641 = vst [vmem:[#allocation3 + $0x8] sm:$0xff] %v633
      %642 = vst [vmem:[#allocation3 + $0x10] sm:$0xff] %v634
      %643 = vst [vmem:[#allocation3 + $0x18] sm:$0xff] %v635
      %644 = vst [vmem:[#allocation3 + $0x20] sm:$0xff] %v636
      %645 = vst [vmem:[#allocation3 + $0x28] sm:$0xff] %v637
      %646 = vst [vmem:[#allocation3 + $0x30] sm:$0xff] %v638
      %647 = vst [vmem:[#allocation3 + $0x38] sm:$0xff] %v639
      %v648 = vld [vmem:[%s498] sm:$0xf]
      %v649 = vld [vmem:[%s498 + $0x4] sm:$0x1]
      %v650 = vunpack.c.l.bf16 %v648
      %v651 = vunpack.c.l.bf16 %v649
      %652 = vst.msk [vmem:[#allocation2 - $0x1] sm:$0xfe] %vm334, %v650
      %653 = vst.msk [vmem:[#allocation2 + $0x7] sm:$0x1] %vm336, %v651
      %v654 = vld [vmem:[%s502] sm:$0xf]
      %v655 = vld [vmem:[%s502 + $0x4] sm:$0x1]
      %v656 = vunpack.c.l.bf16 %v654
      %v657 = vunpack.c.l.bf16 %v655
      %658 = vst.msk [vmem:[#allocation2 + $0x7] sm:$0xfe] %vm334, %v656
      %659 = vst.msk [vmem:[#allocation2 + $0xf] sm:$0x1] %vm336, %v657
      %v660 = vld [vmem:[%s506] sm:$0xf]
      %v661 = vld [vmem:[%s506 + $0x4] sm:$0x1]
      %v662 = vunpack.c.l.bf16 %v660
      %v663 = vunpack.c.l.bf16 %v661
      %664 = vst.msk [vmem:[#allocation2 + $0xf] sm:$0xfe] %vm334, %v662
      %665 = vst.msk [vmem:[#allocation2 + $0x17] sm:$0x1] %vm336, %v663
      %v666 = vld [vmem:[%s510] sm:$0xf]
      %v667 = vld [vmem:[%s510 + $0x4] sm:$0x1]
      %v668 = vunpack.c.l.bf16 %v666
      %v669 = vunpack.c.l.bf16 %v667
      %670 = vst.msk [vmem:[#allocation2 + $0x17] sm:$0xfe] %vm334, %v668
      %671 = vst.msk [vmem:[#allocation2 + $0x1f] sm:$0x1] %vm336, %v669
      %v672 = vld [vmem:[%s514] sm:$0xf]
      %v673 = vld [vmem:[%s514 + $0x4] sm:$0x1]
      %v674 = vunpack.c.l.bf16 %v672
      %v675 = vunpack.c.l.bf16 %v673
      %676 = vst.msk [vmem:[#allocation2 + $0x1f] sm:$0xfe] %vm334, %v674
      %677 = vst.msk [vmem:[#allocation2 + $0x27] sm:$0x1] %vm336, %v675
      %v678 = vld [vmem:[%s518] sm:$0xf]
      %v679 = vld [vmem:[%s518 + $0x4] sm:$0x1]
      %v680 = vunpack.c.l.bf16 %v678
      %v681 = vunpack.c.l.bf16 %v679
      %682 = vst.msk [vmem:[#allocation2 + $0x27] sm:$0xfe] %vm334, %v680
      %683 = vst.msk [vmem:[#allocation2 + $0x2f] sm:$0x1] %vm336, %v681
      %v684 = vld [vmem:[%s522] sm:$0xf]
      %v685 = vld [vmem:[%s522 + $0x4] sm:$0x1]
      %v686 = vunpack.c.l.bf16 %v684
      %v687 = vunpack.c.l.bf16 %v685
      %688 = vst.msk [vmem:[#allocation2 + $0x2f] sm:$0xfe] %vm334, %v686
      %689 = vst.msk [vmem:[#allocation2 + $0x37] sm:$0x1] %vm336, %v687
      %v690 = vld [vmem:[%s526] sm:$0xf]
      %v691 = vld [vmem:[%s526 + $0x4] sm:$0x1]
      %v692 = vunpack.c.l.bf16 %v690
      %v693 = vunpack.c.l.bf16 %v691
      %694 = vst.msk [vmem:[#allocation2 + $0x37] sm:$0xfe] %vm334, %v692
      %695 = vst.msk [vmem:[#allocation2 + $0x3f] sm:$0x1] %vm336, %v693
      %v696 = vld [vmem:[#allocation3] sm:$0xff]
      %v697 = vld [vmem:[#allocation3 + $0x8] sm:$0xff]
      %v698 = vld [vmem:[#allocation3 + $0x10] sm:$0xff]
      %v699 = vld [vmem:[#allocation3 + $0x18] sm:$0xff]
      %v700 = vld [vmem:[#allocation3 + $0x20] sm:$0xff]
      %v701 = vld [vmem:[#allocation3 + $0x28] sm:$0xff]
      %v702 = vld [vmem:[#allocation3 + $0x30] sm:$0xff]
      %v703 = vld [vmem:[#allocation3 + $0x38] sm:$0xff]
      %v704 = vld [vmem:[#allocation2] sm:$0xff]
      %v705 = vld [vmem:[#allocation2 + $0x8] sm:$0xff]
      %v706 = vld [vmem:[#allocation2 + $0x10] sm:$0xff]
      %v707 = vld [vmem:[#allocation2 + $0x18] sm:$0xff]
      %v708 = vld [vmem:[#allocation2 + $0x20] sm:$0xff]
      %v709 = vld [vmem:[#allocation2 + $0x28] sm:$0xff]
      %v710 = vld [vmem:[#allocation2 + $0x30] sm:$0xff]
      %v711 = vld [vmem:[#allocation2 + $0x38] sm:$0xff]
      %v712 = vpack.c.bf16 %v705, %v704
      %v713 = vpack.c.bf16 %v707, %v706
      %v714 = vpack.c.bf16 %v709, %v708
      %v715 = vpack.c.bf16 %v711, %v710
      %s716 = scalar_lea.vmem %s1, 12
      %v717 = vld [vmem:[%s716] sm:$0xf]
      %v719 = vsel %vm182, %v712, 0
      %v722 = vsel %vm182, %v713, 0
      %v725 = vsel %vm182, %v714, 0
      %v728 = vsel %vm182, %v715, 0
      %v731 = vsel %vm245, %v717, 0
      %733 = vmatprep.subr.bf16.mxu0 0
      %734 = vmatpush1.bf16.msra.mxu0 0
      %735 = vmatprep.subr.bf16.mxu0 0
      %736 = vmatpush1.bf16.msra.mxu0 0
      %737 = vmatprep.subr.bf16.mxu0 0
      %738 = vmatpush1.bf16.msra.mxu0 0
      %739 = vmatprep.subr.bf16.mxu0 0
      %740 = vmatpush1.bf16.msra.mxu0 0
      %741 = vmatprep.subr.bf16.mxu0 0
      %742 = vmatpush1.bf16.msra.mxu0 0
      %743 = vmatprep.subr.bf16.mxu0 0
      %744 = vmatpush1.bf16.msra.mxu0 0
      %745 = vmatprep.subr.bf16.mxu0 0
      %746 = vmatpush1.bf16.msra.mxu0 0
      %747 = vmatprep.subr.bf16.mxu0 0
      %748 = vmatpush1.bf16.msra.mxu0 %v731
      %749 = vmatprep.subr.bf16.mxu0 0
      %750 = vmatpush2.bf16.msra.mxu0 0
      %751 = vmatprep.subr.bf16.mxu0 0
      %752 = vmatpush2.bf16.msra.mxu0 0
      %753 = vmatprep.subr.bf16.mxu0 0
      %754 = vmatpush2.bf16.msra.mxu0 0
      %755 = vmatprep.subr.bf16.mxu0 0
      %756 = vmatpush2.bf16.msra.mxu0 0
      %757 = vmatprep.subr.bf16.mxu0 0
      %758 = vmatpush2.bf16.msra.mxu0 0
      %759 = vmatprep.subr.bf16.mxu0 0
      %760 = vmatpush2.bf16.msra.mxu0 0
      %761 = vmatprep.subr.bf16.mxu0 0
      %762 = vmatpush2.bf16.msra.mxu0 0
      %763 = vmatprep.subr.bf16.mxu0 0
      %764 = vmatpush2.bf16.msra.mxu0 0
      %765 = vmatprep.mubr.bf16.mxu0 0
      %766 = vmatmul.mubr.bf16.gmra.mxu0 %v719
      %v767 = vpop.f32.mrf.mxu0
      %v768 = vadd.f32 0.0, %v767
      %v769 = vpop.f32.mrf.mxu0
      %v770 = vpop.f32.mrf.mxu0
      %v771 = vadd.f32 0.0, %v770
      %v772 = vpop.f32.mrf.mxu0
      %773 = vmatprep.mubr.bf16.mxu0 0
      %774 = vmatmul.mubr.bf16.gmra.mxu0 %v722
      %v775 = vpop.f32.mrf.mxu0
      %v776 = vadd.f32 0.0, %v775
      %v777 = vpop.f32.mrf.mxu0
      %v778 = vpop.f32.mrf.mxu0
      %v779 = vadd.f32 0.0, %v778
      %v780 = vpop.f32.mrf.mxu0
      %781 = vmatprep.mubr.bf16.mxu0 0
      %782 = vmatmul.mubr.bf16.gmra.mxu0 %v725
      %v783 = vpop.f32.mrf.mxu0
      %v784 = vadd.f32 0.0, %v783
      %v785 = vpop.f32.mrf.mxu0
      %v786 = vpop.f32.mrf.mxu0
      %v787 = vadd.f32 0.0, %v786
      %v788 = vpop.f32.mrf.mxu0
      %789 = vmatprep.mubr.bf16.mxu0 0
      %790 = vmatmul.mubr.bf16.gmra.mxu0 %v728
      %v791 = vpop.f32.mrf.mxu0
      %v792 = vadd.f32 0.0, %v791
      %v793 = vpop.f32.mrf.mxu0
      %v794 = vpop.f32.mrf.mxu0
      %v795 = vadd.f32 0.0, %v794
      %v796 = vpop.f32.mrf.mxu0
      %797 = vdwg.mxu0
      %v798 = vadd.f32 %v696, %v768
      %v799 = vadd.f32 %v697, %v771
      %v800 = vadd.f32 %v698, %v776
      %v801 = vadd.f32 %v699, %v779
      %v802 = vadd.f32 %v700, %v784
      %v803 = vadd.f32 %v701, %v787
      %v804 = vadd.f32 %v702, %v792
      %v805 = vadd.f32 %v703, %v795
      %806 = vst [vmem:[#allocation3] sm:$0xff] %v798
      %807 = vst [vmem:[#allocation3 + $0x8] sm:$0xff] %v799
      %808 = vst [vmem:[#allocation3 + $0x10] sm:$0xff] %v800
      %809 = vst [vmem:[#allocation3 + $0x18] sm:$0xff] %v801
      %810 = vst [vmem:[#allocation3 + $0x20] sm:$0xff] %v802
      %811 = vst [vmem:[#allocation3 + $0x28] sm:$0xff] %v803
      %812 = vst [vmem:[#allocation3 + $0x30] sm:$0xff] %v804
      %813 = vst [vmem:[#allocation3 + $0x38] sm:$0xff] %v805
      %v814 = vld [vmem:[%s184] sm:$0xf]
      %v815 = vunpack.c.l.bf16 %v814
      %816 = vst.msk [vmem:[#allocation2] sm:$0xff] %vm182, %v815
      %v817 = vld [vmem:[%s188] sm:$0xf]
      %v818 = vunpack.c.l.bf16 %v817
      %819 = vst.msk [vmem:[#allocation2 + $0x8] sm:$0xff] %vm182, %v818
      %v820 = vld [vmem:[%s192] sm:$0xf]
      %v821 = vunpack.c.l.bf16 %v820
      %822 = vst.msk [vmem:[#allocation2 + $0x10] sm:$0xff] %vm182, %v821
      %v823 = vld [vmem:[%s196] sm:$0xf]
      %v824 = vunpack.c.l.bf16 %v823
      %825 = vst.msk [vmem:[#allocation2 + $0x18] sm:$0xff] %vm182, %v824
      %v826 = vld [vmem:[%s200] sm:$0xf]
      %v827 = vunpack.c.l.bf16 %v826
      %828 = vst.msk [vmem:[#allocation2 + $0x20] sm:$0xff] %vm182, %v827
      %v829 = vld [vmem:[%s204] sm:$0xf]
      %v830 = vunpack.c.l.bf16 %v829
      %831 = vst.msk [vmem:[#allocation2 + $0x28] sm:$0xff] %vm182, %v830
      %v832 = vld [vmem:[%s208] sm:$0xf]
      %v833 = vunpack.c.l.bf16 %v832
      %834 = vst.msk [vmem:[#allocation2 + $0x30] sm:$0xff] %vm182, %v833
      %s835 = scalar_lea.vmem %s165, 128
      %v836 = vld [vmem:[%s835] sm:$0xf]
      %v837 = vunpack.c.l.bf16 %v836
      %838 = vst.msk [vmem:[#allocation2 + $0x38] sm:$0xff] %vm182, %v837
      %v839 = vld [vmem:[#allocation3] sm:$0xff]
      %v840 = vld [vmem:[#allocation3 + $0x8] sm:$0xff]
      %v841 = vld [vmem:[#allocation3 + $0x10] sm:$0xff]
      %v842 = vld [vmem:[#allocation3 + $0x18] sm:$0xff]
      %v843 = vld [vmem:[#allocation3 + $0x20] sm:$0xff]
      %v844 = vld [vmem:[#allocation3 + $0x28] sm:$0xff]
      %v845 = vld [vmem:[#allocation3 + $0x30] sm:$0xff]
      %v846 = vld [vmem:[#allocation3 + $0x38] sm:$0xff]
      %v847 = vld [vmem:[#allocation2] sm:$0xff]
      %v848 = vld [vmem:[#allocation2 + $0x8] sm:$0xff]
      %v849 = vld [vmem:[#allocation2 + $0x10] sm:$0xff]
      %v850 = vld [vmem:[#allocation2 + $0x18] sm:$0xff]
      %v851 = vld [vmem:[#allocation2 + $0x20] sm:$0xff]
      %v852 = vld [vmem:[#allocation2 + $0x28] sm:$0xff]
      %v853 = vld [vmem:[#allocation2 + $0x30] sm:$0xff]
      %v854 = vld [vmem:[#allocation2 + $0x38] sm:$0xff]
      %v855 = vpack.c.bf16 %v848, %v847
      %v856 = vpack.c.bf16 %v850, %v849
      %v857 = vpack.c.bf16 %v852, %v851
      %v858 = vpack.c.bf16 %v854, %v853
      %s859 = scalar_lea.vmem %s1, 16
      %v860 = vld [vmem:[%s859] sm:$0xf]
      %v862 = vsel %vm182, %v855, 0
      %v865 = vsel %vm182, %v856, 0
      %v868 = vsel %vm182, %v857, 0
      %v871 = vsel %vm182, %v858, 0
      %v874 = vsel %vm245, %v860, 0
      %876 = vmatprep.subr.bf16.mxu0 0
      %877 = vmatpush1.bf16.msra.mxu0 0
      %878 = vmatprep.subr.bf16.mxu0 0
      %879 = vmatpush1.bf16.msra.mxu0 0
      %880 = vmatprep.subr.bf16.mxu0 0
      %881 = vmatpush1.bf16.msra.mxu0 0
      %882 = vmatprep.subr.bf16.mxu0 0
      %883 = vmatpush1.bf16.msra.mxu0 0
      %884 = vmatprep.subr.bf16.mxu0 0
      %885 = vmatpush1.bf16.msra.mxu0 0
      %886 = vmatprep.subr.bf16.mxu0 0
      %887 = vmatpush1.bf16.msra.mxu0 0
      %888 = vmatprep.subr.bf16.mxu0 0
      %889 = vmatpush1.bf16.msra.mxu0 0
      %890 = vmatprep.subr.bf16.mxu0 0
      %891 = vmatpush1.bf16.msra.mxu0 %v874
      %892 = vmatprep.subr.bf16.mxu0 0
      %893 = vmatpush2.bf16.msra.mxu0 0
      %894 = vmatprep.subr.bf16.mxu0 0
      %895 = vmatpush2.bf16.msra.mxu0 0
      %896 = vmatprep.subr.bf16.mxu0 0
      %897 = vmatpush2.bf16.msra.mxu0 0
      %898 = vmatprep.subr.bf16.mxu0 0
      %899 = vmatpush2.bf16.msra.mxu0 0
      %900 = vmatprep.subr.bf16.mxu0 0
      %901 = vmatpush2.bf16.msra.mxu0 0
      %902 = vmatprep.subr.bf16.mxu0 0
      %903 = vmatpush2.bf16.msra.mxu0 0
      %904 = vmatprep.subr.bf16.mxu0 0
      %905 = vmatpush2.bf16.msra.mxu0 0
      %906 = vmatprep.subr.bf16.mxu0 0
      %907 = vmatpush2.bf16.msra.mxu0 0
      %908 = vmatprep.mubr.bf16.mxu0 0
      %909 = vmatmul.mubr.bf16.gmra.mxu0 %v862
      %v910 = vpop.f32.mrf.mxu0
      %v911 = vadd.f32 0.0, %v910
      %v912 = vpop.f32.mrf.mxu0
      %v913 = vpop.f32.mrf.mxu0
      %v914 = vadd.f32 0.0, %v913
      %v915 = vpop.f32.mrf.mxu0
      %916 = vmatprep.mubr.bf16.mxu0 0
      %917 = vmatmul.mubr.bf16.gmra.mxu0 %v865
      %v918 = vpop.f32.mrf.mxu0
      %v919 = vadd.f32 0.0, %v918
      %v920 = vpop.f32.mrf.mxu0
      %v921 = vpop.f32.mrf.mxu0
      %v922 = vadd.f32 0.0, %v921
      %v923 = vpop.f32.mrf.mxu0
      %924 = vmatprep.mubr.bf16.mxu0 0
      %925 = vmatmul.mubr.bf16.gmra.mxu0 %v868
      %v926 = vpop.f32.mrf.mxu0
      %v927 = vadd.f32 0.0, %v926
      %v928 = vpop.f32.mrf.mxu0
      %v929 = vpop.f32.mrf.mxu0
      %v930 = vadd.f32 0.0, %v929
      %v931 = vpop.f32.mrf.mxu0
      %932 = vmatprep.mubr.bf16.mxu0 0
      %933 = vmatmul.mubr.bf16.gmra.mxu0 %v871
      %v934 = vpop.f32.mrf.mxu0
      %v935 = vadd.f32 0.0, %v934
      %v936 = vpop.f32.mrf.mxu0
      %v937 = vpop.f32.mrf.mxu0
      %v938 = vadd.f32 0.0, %v937
      %v939 = vpop.f32.mrf.mxu0
      %940 = vdwg.mxu0
      %v941 = vadd.f32 %v839, %v911
      %v942 = vadd.f32 %v840, %v914
      %v943 = vadd.f32 %v841, %v919
      %v944 = vadd.f32 %v842, %v922
      %v945 = vadd.f32 %v843, %v927
      %v946 = vadd.f32 %v844, %v930
      %v947 = vadd.f32 %v845, %v935
      %v948 = vadd.f32 %v846, %v938
      %949 = vst [vmem:[#allocation3] sm:$0xff] %v941
      %950 = vst [vmem:[#allocation3 + $0x8] sm:$0xff] %v942
      %951 = vst [vmem:[#allocation3 + $0x10] sm:$0xff] %v943
      %952 = vst [vmem:[#allocation3 + $0x18] sm:$0xff] %v944
      %953 = vst [vmem:[#allocation3 + $0x20] sm:$0xff] %v945
      %954 = vst [vmem:[#allocation3 + $0x28] sm:$0xff] %v946
      %955 = vst [vmem:[#allocation3 + $0x30] sm:$0xff] %v947
      %956 = vst [vmem:[#allocation3 + $0x38] sm:$0xff] %v948
      %v957 = vld [vmem:[%s184] sm:$0xf]
      %v958 = vld [vmem:[%s184 + $0x4] sm:$0x1]
      %v959 = vunpack.c.l.bf16 %v957
      %v960 = vunpack.c.l.bf16 %v958
      %961 = vst.msk [vmem:[#allocation2 - $0x1] sm:$0xfe] %vm334, %v959
      %962 = vst.msk [vmem:[#allocation2 + $0x7] sm:$0x1] %vm336, %v960
      %v963 = vld [vmem:[%s188] sm:$0xf]
      %v964 = vld [vmem:[%s188 + $0x4] sm:$0x1]
      %v965 = vunpack.c.l.bf16 %v963
      %v966 = vunpack.c.l.bf16 %v964
      %967 = vst.msk [vmem:[#allocation2 + $0x7] sm:$0xfe] %vm334, %v965
      %968 = vst.msk [vmem:[#allocation2 + $0xf] sm:$0x1] %vm336, %v966
      %v969 = vld [vmem:[%s192] sm:$0xf]
      %v970 = vld [vmem:[%s192 + $0x4] sm:$0x1]
      %v971 = vunpack.c.l.bf16 %v969
      %v972 = vunpack.c.l.bf16 %v970
      %973 = vst.msk [vmem:[#allocation2 + $0xf] sm:$0xfe] %vm334, %v971
      %974 = vst.msk [vmem:[#allocation2 + $0x17] sm:$0x1] %vm336, %v972
      %v975 = vld [vmem:[%s196] sm:$0xf]
      %v976 = vld [vmem:[%s196 + $0x4] sm:$0x1]
      %v977 = vunpack.c.l.bf16 %v975
      %v978 = vunpack.c.l.bf16 %v976
      %979 = vst.msk [vmem:[#allocation2 + $0x17] sm:$0xfe] %vm334, %v977
      %980 = vst.msk [vmem:[#allocation2 + $0x1f] sm:$0x1] %vm336, %v978
      %v981 = vld [vmem:[%s200] sm:$0xf]
      %v982 = vld [vmem:[%s200 + $0x4] sm:$0x1]
      %v983 = vunpack.c.l.bf16 %v981
      %v984 = vunpack.c.l.bf16 %v982
      %985 = vst.msk [vmem:[#allocation2 + $0x1f] sm:$0xfe] %vm334, %v983
      %986 = vst.msk [vmem:[#allocation2 + $0x27] sm:$0x1] %vm336, %v984
      %v987 = vld [vmem:[%s204] sm:$0xf]
      %v988 = vld [vmem:[%s204 + $0x4] sm:$0x1]
      %v989 = vunpack.c.l.bf16 %v987
      %v990 = vunpack.c.l.bf16 %v988
      %991 = vst.msk [vmem:[#allocation2 + $0x27] sm:$0xfe] %vm334, %v989
      %992 = vst.msk [vmem:[#allocation2 + $0x2f] sm:$0x1] %vm336, %v990
      %v993 = vld [vmem:[%s208] sm:$0xf]
      %v994 = vld [vmem:[%s208 + $0x4] sm:$0x1]
      %v995 = vunpack.c.l.bf16 %v993
      %v996 = vunpack.c.l.bf16 %v994
      %997 = vst.msk [vmem:[#allocation2 + $0x2f] sm:$0xfe] %vm334, %v995
      %998 = vst.msk [vmem:[#allocation2 + $0x37] sm:$0x1] %vm336, %v996
      %v999 = vld [vmem:[%s835] sm:$0xf]
      %v1000 = vld [vmem:[%s835 + $0x4] sm:$0x1]
      %v1001 = vunpack.c.l.bf16 %v999
      %v1002 = vunpack.c.l.bf16 %v1000
      %1003 = vst.msk [vmem:[#allocation2 + $0x37] sm:$0xfe] %vm334, %v1001
      %1004 = vst.msk [vmem:[#allocation2 + $0x3f] sm:$0x1] %vm336, %v1002
      %v1005 = vld [vmem:[#allocation3] sm:$0xff]
      %v1006 = vld [vmem:[#allocation3 + $0x8] sm:$0xff]
      %v1007 = vld [vmem:[#allocation3 + $0x10] sm:$0xff]
      %v1008 = vld [vmem:[#allocation3 + $0x18] sm:$0xff]
      %v1009 = vld [vmem:[#allocation3 + $0x20] sm:$0xff]
      %v1010 = vld [vmem:[#allocation3 + $0x28] sm:$0xff]
      %v1011 = vld [vmem:[#allocation3 + $0x30] sm:$0xff]
      %v1012 = vld [vmem:[#allocation3 + $0x38] sm:$0xff]
      %v1013 = vld [vmem:[#allocation2] sm:$0xff]
      %v1014 = vld [vmem:[#allocation2 + $0x8] sm:$0xff]
      %v1015 = vld [vmem:[#allocation2 + $0x10] sm:$0xff]
      %v1016 = vld [vmem:[#allocation2 + $0x18] sm:$0xff]
      %v1017 = vld [vmem:[#allocation2 + $0x20] sm:$0xff]
      %v1018 = vld [vmem:[#allocation2 + $0x28] sm:$0xff]
      %v1019 = vld [vmem:[#allocation2 + $0x30] sm:$0xff]
      %v1020 = vld [vmem:[#allocation2 + $0x38] sm:$0xff]
      %v1021 = vpack.c.bf16 %v1014, %v1013
      %v1022 = vpack.c.bf16 %v1016, %v1015
      %v1023 = vpack.c.bf16 %v1018, %v1017
      %v1024 = vpack.c.bf16 %v1020, %v1019
      %s1025 = scalar_lea.vmem %s1, 20
      %v1026 = vld [vmem:[%s1025] sm:$0xf]
      %v1028 = vsel %vm182, %v1021, 0
      %v1031 = vsel %vm182, %v1022, 0
      %v1034 = vsel %vm182, %v1023, 0
      %v1037 = vsel %vm182, %v1024, 0
      %v1040 = vsel %vm245, %v1026, 0
      %1042 = vmatprep.subr.bf16.mxu0 0
      %1043 = vmatpush1.bf16.msra.mxu0 0
      %1044 = vmatprep.subr.bf16.mxu0 0
      %1045 = vmatpush1.bf16.msra.mxu0 0
      %1046 = vmatprep.subr.bf16.mxu0 0
      %1047 = vmatpush1.bf16.msra.mxu0 0
      %1048 = vmatprep.subr.bf16.mxu0 0
      %1049 = vmatpush1.bf16.msra.mxu0 0
      %1050 = vmatprep.subr.bf16.mxu0 0
      %1051 = vmatpush1.bf16.msra.mxu0 0
      %1052 = vmatprep.subr.bf16.mxu0 0
      %1053 = vmatpush1.bf16.msra.mxu0 0
      %1054 = vmatprep.subr.bf16.mxu0 0
      %1055 = vmatpush1.bf16.msra.mxu0 0
      %1056 = vmatprep.subr.bf16.mxu0 0
      %1057 = vmatpush1.bf16.msra.mxu0 %v1040
      %1058 = vmatprep.subr.bf16.mxu0 0
      %1059 = vmatpush2.bf16.msra.mxu0 0
      %1060 = vmatprep.subr.bf16.mxu0 0
      %1061 = vmatpush2.bf16.msra.mxu0 0
      %1062 = vmatprep.subr.bf16.mxu0 0
      %1063 = vmatpush2.bf16.msra.mxu0 0
      %1064 = vmatprep.subr.bf16.mxu0 0
      %1065 = vmatpush2.bf16.msra.mxu0 0
      %1066 = vmatprep.subr.bf16.mxu0 0
      %1067 = vmatpush2.bf16.msra.mxu0 0
      %1068 = vmatprep.subr.bf16.mxu0 0
      %1069 = vmatpush2.bf16.msra.mxu0 0
      %1070 = vmatprep.subr.bf16.mxu0 0
      %1071 = vmatpush2.bf16.msra.mxu0 0
      %1072 = vmatprep.subr.bf16.mxu0 0
      %1073 = vmatpush2.bf16.msra.mxu0 0
      %1074 = vmatprep.mubr.bf16.mxu0 0
      %1075 = vmatmul.mubr.bf16.gmra.mxu0 %v1028
      %v1076 = vpop.f32.mrf.mxu0
      %v1077 = vadd.f32 0.0, %v1076
      %v1078 = vpop.f32.mrf.mxu0
      %v1079 = vpop.f32.mrf.mxu0
      %v1080 = vadd.f32 0.0, %v1079
      %v1081 = vpop.f32.mrf.mxu0
      %1082 = vmatprep.mubr.bf16.mxu0 0
      %1083 = vmatmul.mubr.bf16.gmra.mxu0 %v1031
      %v1084 = vpop.f32.mrf.mxu0
      %v1085 = vadd.f32 0.0, %v1084
      %v1086 = vpop.f32.mrf.mxu0
      %v1087 = vpop.f32.mrf.mxu0
      %v1088 = vadd.f32 0.0, %v1087
      %v1089 = vpop.f32.mrf.mxu0
      %1090 = vmatprep.mubr.bf16.mxu0 0
      %1091 = vmatmul.mubr.bf16.gmra.mxu0 %v1034
      %v1092 = vpop.f32.mrf.mxu0
      %v1093 = vadd.f32 0.0, %v1092
      %v1094 = vpop.f32.mrf.mxu0
      %v1095 = vpop.f32.mrf.mxu0
      %v1096 = vadd.f32 0.0, %v1095
      %v1097 = vpop.f32.mrf.mxu0
      %1098 = vmatprep.mubr.bf16.mxu0 0
      %1099 = vmatmul.mubr.bf16.gmra.mxu0 %v1037
      %v1100 = vpop.f32.mrf.mxu0
      %v1101 = vadd.f32 0.0, %v1100
      %v1102 = vpop.f32.mrf.mxu0
      %v1103 = vpop.f32.mrf.mxu0
      %v1104 = vadd.f32 0.0, %v1103
      %v1105 = vpop.f32.mrf.mxu0
      %1106 = vdwg.mxu0
      %v1107 = vadd.f32 %v1005, %v1077
      %v1108 = vadd.f32 %v1006, %v1080
      %v1109 = vadd.f32 %v1007, %v1085
      %v1110 = vadd.f32 %v1008, %v1088
      %v1111 = vadd.f32 %v1009, %v1093
      %v1112 = vadd.f32 %v1010, %v1096
      %v1113 = vadd.f32 %v1011, %v1101
      %v1114 = vadd.f32 %v1012, %v1104
      %1115 = vst [vmem:[#allocation3] sm:$0xff] %v1107
      %1116 = vst [vmem:[#allocation3 + $0x8] sm:$0xff] %v1108
      %1117 = vst [vmem:[#allocation3 + $0x10] sm:$0xff] %v1109
      %1118 = vst [vmem:[#allocation3 + $0x18] sm:$0xff] %v1110
      %1119 = vst [vmem:[#allocation3 + $0x20] sm:$0xff] %v1111
      %1120 = vst [vmem:[#allocation3 + $0x28] sm:$0xff] %v1112
      %1121 = vst [vmem:[#allocation3 + $0x30] sm:$0xff] %v1113
      %1122 = vst [vmem:[#allocation3 + $0x38] sm:$0xff] %v1114
      %v1123 = vld [vmem:[%s502] sm:$0xf]
      %v1124 = vunpack.c.l.bf16 %v1123
      %1125 = vst.msk [vmem:[#allocation2] sm:$0xff] %vm182, %v1124
      %v1126 = vld [vmem:[%s506] sm:$0xf]
      %v1127 = vunpack.c.l.bf16 %v1126
      %1128 = vst.msk [vmem:[#allocation2 + $0x8] sm:$0xff] %vm182, %v1127
      %v1129 = vld [vmem:[%s510] sm:$0xf]
      %v1130 = vunpack.c.l.bf16 %v1129
      %1131 = vst.msk [vmem:[#allocation2 + $0x10] sm:$0xff] %vm182, %v1130
      %v1132 = vld [vmem:[%s514] sm:$0xf]
      %v1133 = vunpack.c.l.bf16 %v1132
      %1134 = vst.msk [vmem:[#allocation2 + $0x18] sm:$0xff] %vm182, %v1133
      %v1135 = vld [vmem:[%s518] sm:$0xf]
      %v1136 = vunpack.c.l.bf16 %v1135
      %1137 = vst.msk [vmem:[#allocation2 + $0x20] sm:$0xff] %vm182, %v1136
      %v1138 = vld [vmem:[%s522] sm:$0xf]
      %v1139 = vunpack.c.l.bf16 %v1138
      %1140 = vst.msk [vmem:[#allocation2 + $0x28] sm:$0xff] %vm182, %v1139
      %v1141 = vld [vmem:[%s526] sm:$0xf]
      %v1142 = vunpack.c.l.bf16 %v1141
      %1143 = vst.msk [vmem:[#allocation2 + $0x30] sm:$0xff] %vm182, %v1142
      %s1144 = scalar_lea.vmem %s165, 136
      %v1145 = vld [vmem:[%s1144] sm:$0xf]
      %v1146 = vunpack.c.l.bf16 %v1145
      %1147 = vst.msk [vmem:[#allocation2 + $0x38] sm:$0xff] %vm182, %v1146
      %v1148 = vld [vmem:[#allocation3] sm:$0xff]
      %v1149 = vld [vmem:[#allocation3 + $0x8] sm:$0xff]
      %v1150 = vld [vmem:[#allocation3 + $0x10] sm:$0xff]
      %v1151 = vld [vmem:[#allocation3 + $0x18] sm:$0xff]
      %v1152 = vld [vmem:[#allocation3 + $0x20] sm:$0xff]
      %v1153 = vld [vmem:[#allocation3 + $0x28] sm:$0xff]
      %v1154 = vld [vmem:[#allocation3 + $0x30] sm:$0xff]
      %v1155 = vld [vmem:[#allocation3 + $0x38] sm:$0xff]
      %v1156 = vld [vmem:[#allocation2] sm:$0xff]
      %v1157 = vld [vmem:[#allocation2 + $0x8] sm:$0xff]
      %v1158 = vld [vmem:[#allocation2 + $0x10] sm:$0xff]
      %v1159 = vld [vmem:[#allocation2 + $0x18] sm:$0xff]
      %v1160 = vld [vmem:[#allocation2 + $0x20] sm:$0xff]
      %v1161 = vld [vmem:[#allocation2 + $0x28] sm:$0xff]
      %v1162 = vld [vmem:[#allocation2 + $0x30] sm:$0xff]
      %v1163 = vld [vmem:[#allocation2 + $0x38] sm:$0xff]
      %v1164 = vpack.c.bf16 %v1157, %v1156
      %v1165 = vpack.c.bf16 %v1159, %v1158
      %v1166 = vpack.c.bf16 %v1161, %v1160
      %v1167 = vpack.c.bf16 %v1163, %v1162
      %s1168 = scalar_lea.vmem %s1, 24
      %v1169 = vld [vmem:[%s1168] sm:$0xf]
      %v1171 = vsel %vm182, %v1164, 0
      %v1174 = vsel %vm182, %v1165, 0
      %v1177 = vsel %vm182, %v1166, 0
      %v1180 = vsel %vm182, %v1167, 0
      %v1183 = vsel %vm245, %v1169, 0
      %1185 = vmatprep.subr.bf16.mxu0 0
      %1186 = vmatpush1.bf16.msra.mxu0 0
      %1187 = vmatprep.subr.bf16.mxu0 0
      %1188 = vmatpush1.bf16.msra.mxu0 0
      %1189 = vmatprep.subr.bf16.mxu0 0
      %1190 = vmatpush1.bf16.msra.mxu0 0
      %1191 = vmatprep.subr.bf16.mxu0 0
      %1192 = vmatpush1.bf16.msra.mxu0 0
      %1193 = vmatprep.subr.bf16.mxu0 0
      %1194 = vmatpush1.bf16.msra.mxu0 0
      %1195 = vmatprep.subr.bf16.mxu0 0
      %1196 = vmatpush1.bf16.msra.mxu0 0
      %1197 = vmatprep.subr.bf16.mxu0 0
      %1198 = vmatpush1.bf16.msra.mxu0 0
      %1199 = vmatprep.subr.bf16.mxu0 0
      %1200 = vmatpush1.bf16.msra.mxu0 %v1183
      %1201 = vmatprep.subr.bf16.mxu0 0
      %1202 = vmatpush2.bf16.msra.mxu0 0
      %1203 = vmatprep.subr.bf16.mxu0 0
      %1204 = vmatpush2.bf16.msra.mxu0 0
      %1205 = vmatprep.subr.bf16.mxu0 0
      %1206 = vmatpush2.bf16.msra.mxu0 0
      %1207 = vmatprep.subr.bf16.mxu0 0
      %1208 = vmatpush2.bf16.msra.mxu0 0
      %1209 = vmatprep.subr.bf16.mxu0 0
      %1210 = vmatpush2.bf16.msra.mxu0 0
      %1211 = vmatprep.subr.bf16.mxu0 0
      %1212 = vmatpush2.bf16.msra.mxu0 0
      %1213 = vmatprep.subr.bf16.mxu0 0
      %1214 = vmatpush2.bf16.msra.mxu0 0
      %1215 = vmatprep.subr.bf16.mxu0 0
      %1216 = vmatpush2.bf16.msra.mxu0 0
      %1217 = vmatprep.mubr.bf16.mxu0 0
      %1218 = vmatmul.mubr.bf16.gmra.mxu0 %v1171
      %v1219 = vpop.f32.mrf.mxu0
      %v1220 = vadd.f32 0.0, %v1219
      %v1221 = vpop.f32.mrf.mxu0
      %v1222 = vpop.f32.mrf.mxu0
      %v1223 = vadd.f32 0.0, %v1222
      %v1224 = vpop.f32.mrf.mxu0
      %1225 = vmatprep.mubr.bf16.mxu0 0
      %1226 = vmatmul.mubr.bf16.gmra.mxu0 %v1174
      %v1227 = vpop.f32.mrf.mxu0
      %v1228 = vadd.f32 0.0, %v1227
      %v1229 = vpop.f32.mrf.mxu0
      %v1230 = vpop.f32.mrf.mxu0
      %v1231 = vadd.f32 0.0, %v1230
      %v1232 = vpop.f32.mrf.mxu0
      %1233 = vmatprep.mubr.bf16.mxu0 0
      %1234 = vmatmul.mubr.bf16.gmra.mxu0 %v1177
      %v1235 = vpop.f32.mrf.mxu0
      %v1236 = vadd.f32 0.0, %v1235
      %v1237 = vpop.f32.mrf.mxu0
      %v1238 = vpop.f32.mrf.mxu0
      %v1239 = vadd.f32 0.0, %v1238
      %v1240 = vpop.f32.mrf.mxu0
      %1241 = vmatprep.mubr.bf16.mxu0 0
      %1242 = vmatmul.mubr.bf16.gmra.mxu0 %v1180
      %v1243 = vpop.f32.mrf.mxu0
      %v1244 = vadd.f32 0.0, %v1243
      %v1245 = vpop.f32.mrf.mxu0
      %v1246 = vpop.f32.mrf.mxu0
      %v1247 = vadd.f32 0.0, %v1246
      %v1248 = vpop.f32.mrf.mxu0
      %1249 = vdwg.mxu0
      %v1250 = vadd.f32 %v1148, %v1220
      %v1251 = vadd.f32 %v1149, %v1223
      %v1252 = vadd.f32 %v1150, %v1228
      %v1253 = vadd.f32 %v1151, %v1231
      %v1254 = vadd.f32 %v1152, %v1236
      %v1255 = vadd.f32 %v1153, %v1239
      %v1256 = vadd.f32 %v1154, %v1244
      %v1257 = vadd.f32 %v1155, %v1247
      %1258 = vst [vmem:[#allocation3] sm:$0xff] %v1250
      %1259 = vst [vmem:[#allocation3 + $0x8] sm:$0xff] %v1251
      %1260 = vst [vmem:[#allocation3 + $0x10] sm:$0xff] %v1252
      %1261 = vst [vmem:[#allocation3 + $0x18] sm:$0xff] %v1253
      %1262 = vst [vmem:[#allocation3 + $0x20] sm:$0xff] %v1254
      %1263 = vst [vmem:[#allocation3 + $0x28] sm:$0xff] %v1255
      %1264 = vst [vmem:[#allocation3 + $0x30] sm:$0xff] %v1256
      %1265 = vst [vmem:[#allocation3 + $0x38] sm:$0xff] %v1257
      %v1266 = vld [vmem:[%s502] sm:$0xf]
      %v1267 = vld [vmem:[%s502 + $0x4] sm:$0x1]
      %v1268 = vunpack.c.l.bf16 %v1266
      %v1269 = vunpack.c.l.bf16 %v1267
      %1270 = vst.msk [vmem:[#allocation2 - $0x1] sm:$0xfe] %vm334, %v1268
      %1271 = vst.msk [vmem:[#allocation2 + $0x7] sm:$0x1] %vm336, %v1269
      %v1272 = vld [vmem:[%s506] sm:$0xf]
      %v1273 = vld [vmem:[%s506 + $0x4] sm:$0x1]
      %v1274 = vunpack.c.l.bf16 %v1272
      %v1275 = vunpack.c.l.bf16 %v1273
      %1276 = vst.msk [vmem:[#allocation2 + $0x7] sm:$0xfe] %vm334, %v1274
      %1277 = vst.msk [vmem:[#allocation2 + $0xf] sm:$0x1] %vm336, %v1275
      %v1278 = vld [vmem:[%s510] sm:$0xf]
      %v1279 = vld [vmem:[%s510 + $0x4] sm:$0x1]
      %v1280 = vunpack.c.l.bf16 %v1278
      %v1281 = vunpack.c.l.bf16 %v1279
      %1282 = vst.msk [vmem:[#allocation2 + $0xf] sm:$0xfe] %vm334, %v1280
      %1283 = vst.msk [vmem:[#allocation2 + $0x17] sm:$0x1] %vm336, %v1281
      %v1284 = vld [vmem:[%s514] sm:$0xf]
      %v1285 = vld [vmem:[%s514 + $0x4] sm:$0x1]
      %v1286 = vunpack.c.l.bf16 %v1284
      %v1287 = vunpack.c.l.bf16 %v1285
      %1288 = vst.msk [vmem:[#allocation2 + $0x17] sm:$0xfe] %vm334, %v1286
      %1289 = vst.msk [vmem:[#allocation2 + $0x1f] sm:$0x1] %vm336, %v1287
      %v1290 = vld [vmem:[%s518] sm:$0xf]
      %v1291 = vld [vmem:[%s518 + $0x4] sm:$0x1]
      %v1292 = vunpack.c.l.bf16 %v1290
      %v1293 = vunpack.c.l.bf16 %v1291
      %1294 = vst.msk [vmem:[#allocation2 + $0x1f] sm:$0xfe] %vm334, %v1292
      %1295 = vst.msk [vmem:[#allocation2 + $0x27] sm:$0x1] %vm336, %v1293
      %v1296 = vld [vmem:[%s522] sm:$0xf]
      %v1297 = vld [vmem:[%s522 + $0x4] sm:$0x1]
      %v1298 = vunpack.c.l.bf16 %v1296
      %v1299 = vunpack.c.l.bf16 %v1297
      %1300 = vst.msk [vmem:[#allocation2 + $0x27] sm:$0xfe] %vm334, %v1298
      %1301 = vst.msk [vmem:[#allocation2 + $0x2f] sm:$0x1] %vm336, %v1299
      %v1302 = vld [vmem:[%s526] sm:$0xf]
      %v1303 = vld [vmem:[%s526 + $0x4] sm:$0x1]
      %v1304 = vunpack.c.l.bf16 %v1302
      %v1305 = vunpack.c.l.bf16 %v1303
      %1306 = vst.msk [vmem:[#allocation2 + $0x2f] sm:$0xfe] %vm334, %v1304
      %1307 = vst.msk [vmem:[#allocation2 + $0x37] sm:$0x1] %vm336, %v1305
      %v1308 = vld [vmem:[%s1144] sm:$0xf]
      %v1309 = vld [vmem:[%s1144 + $0x4] sm:$0x1]
      %v1310 = vunpack.c.l.bf16 %v1308
      %v1311 = vunpack.c.l.bf16 %v1309
      %1312 = vst.msk [vmem:[#allocation2 + $0x37] sm:$0xfe] %vm334, %v1310
      %1313 = vst.msk [vmem:[#allocation2 + $0x3f] sm:$0x1] %vm336, %v1311
      %v1314 = vld [vmem:[#allocation3] sm:$0xff]
      %v1315 = vld [vmem:[#allocation3 + $0x8] sm:$0xff]
      %v1316 = vld [vmem:[#allocation3 + $0x10] sm:$0xff]
      %v1317 = vld [vmem:[#allocation3 + $0x18] sm:$0xff]
      %v1318 = vld [vmem:[#allocation3 + $0x20] sm:$0xff]
      %v1319 = vld [vmem:[#allocation3 + $0x28] sm:$0xff]
      %v1320 = vld [vmem:[#allocation3 + $0x30] sm:$0xff]
      %v1321 = vld [vmem:[#allocation3 + $0x38] sm:$0xff]
      %v1322 = vld [vmem:[#allocation2] sm:$0xff]
      %v1323 = vld [vmem:[#allocation2 + $0x8] sm:$0xff]
      %v1324 = vld [vmem:[#allocation2 + $0x10] sm:$0xff]
      %v1325 = vld [vmem:[#allocation2 + $0x18] sm:$0xff]
      %v1326 = vld [vmem:[#allocation2 + $0x20] sm:$0xff]
      %v1327 = vld [vmem:[#allocation2 + $0x28] sm:$0xff]
      %v1328 = vld [vmem:[#allocation2 + $0x30] sm:$0xff]
      %v1329 = vld [vmem:[#allocation2 + $0x38] sm:$0xff]
      %v1330 = vpack.c.bf16 %v1323, %v1322
      %v1331 = vpack.c.bf16 %v1325, %v1324
      %v1332 = vpack.c.bf16 %v1327, %v1326
      %v1333 = vpack.c.bf16 %v1329, %v1328
      %s1334 = scalar_lea.vmem %s1, 28
      %v1335 = vld [vmem:[%s1334] sm:$0xf]
      %v1337 = vsel %vm182, %v1330, 0
      %v1340 = vsel %vm182, %v1331, 0
      %v1343 = vsel %vm182, %v1332, 0
      %v1346 = vsel %vm182, %v1333, 0
      %v1349 = vsel %vm245, %v1335, 0
      %1351 = vmatprep.subr.bf16.mxu0 0
      %1352 = vmatpush1.bf16.msra.mxu0 0
      %1353 = vmatprep.subr.bf16.mxu0 0
      %1354 = vmatpush1.bf16.msra.mxu0 0
      %1355 = vmatprep.subr.bf16.mxu0 0
      %1356 = vmatpush1.bf16.msra.mxu0 0
      %1357 = vmatprep.subr.bf16.mxu0 0
      %1358 = vmatpush1.bf16.msra.mxu0 0
      %1359 = vmatprep.subr.bf16.mxu0 0
      %1360 = vmatpush1.bf16.msra.mxu0 0
      %1361 = vmatprep.subr.bf16.mxu0 0
      %1362 = vmatpush1.bf16.msra.mxu0 0
      %1363 = vmatprep.subr.bf16.mxu0 0
      %1364 = vmatpush1.bf16.msra.mxu0 0
      %1365 = vmatprep.subr.bf16.mxu0 0
      %1366 = vmatpush1.bf16.msra.mxu0 %v1349
      %1367 = vmatprep.subr.bf16.mxu0 0
      %1368 = vmatpush2.bf16.msra.mxu0 0
      %1369 = vmatprep.subr.bf16.mxu0 0
      %1370 = vmatpush2.bf16.msra.mxu0 0
      %1371 = vmatprep.subr.bf16.mxu0 0
      %1372 = vmatpush2.bf16.msra.mxu0 0
      %1373 = vmatprep.subr.bf16.mxu0 0
      %1374 = vmatpush2.bf16.msra.mxu0 0
      %1375 = vmatprep.subr.bf16.mxu0 0
      %1376 = vmatpush2.bf16.msra.mxu0 0
      %1377 = vmatprep.subr.bf16.mxu0 0
      %1378 = vmatpush2.bf16.msra.mxu0 0
      %1379 = vmatprep.subr.bf16.mxu0 0
      %1380 = vmatpush2.bf16.msra.mxu0 0
      %1381 = vmatprep.subr.bf16.mxu0 0
      %1382 = vmatpush2.bf16.msra.mxu0 0
      %1383 = vmatprep.mubr.bf16.mxu0 0
      %1384 = vmatmul.mubr.bf16.gmra.mxu0 %v1337
      %v1385 = vpop.f32.mrf.mxu0
      %v1386 = vadd.f32 0.0, %v1385
      %v1387 = vpop.f32.mrf.mxu0
      %v1388 = vpop.f32.mrf.mxu0
      %v1389 = vadd.f32 0.0, %v1388
      %v1390 = vpop.f32.mrf.mxu0
      %1391 = vmatprep.mubr.bf16.mxu0 0
      %1392 = vmatmul.mubr.bf16.gmra.mxu0 %v1340
      %v1393 = vpop.f32.mrf.mxu0
      %v1394 = vadd.f32 0.0, %v1393
      %v1395 = vpop.f32.mrf.mxu0
      %v1396 = vpop.f32.mrf.mxu0
      %v1397 = vadd.f32 0.0, %v1396
      %v1398 = vpop.f32.mrf.mxu0
      %1399 = vmatprep.mubr.bf16.mxu0 0
      %1400 = vmatmul.mubr.bf16.gmra.mxu0 %v1343
      %v1401 = vpop.f32.mrf.mxu0
      %v1402 = vadd.f32 0.0, %v1401
      %v1403 = vpop.f32.mrf.mxu0
      %v1404 = vpop.f32.mrf.mxu0
      %v1405 = vadd.f32 0.0, %v1404
      %v1406 = vpop.f32.mrf.mxu0
      %1407 = vmatprep.mubr.bf16.mxu0 0
      %1408 = vmatmul.mubr.bf16.gmra.mxu0 %v1346
      %v1409 = vpop.f32.mrf.mxu0
      %v1410 = vadd.f32 0.0, %v1409
      %v1411 = vpop.f32.mrf.mxu0
      %v1412 = vpop.f32.mrf.mxu0
      %v1413 = vadd.f32 0.0, %v1412
      %v1414 = vpop.f32.mrf.mxu0
      %1415 = vdwg.mxu0
      %v1416 = vadd.f32 %v1314, %v1386
      %v1417 = vadd.f32 %v1315, %v1389
      %v1418 = vadd.f32 %v1316, %v1394
      %v1419 = vadd.f32 %v1317, %v1397
      %v1420 = vadd.f32 %v1318, %v1402
      %v1421 = vadd.f32 %v1319, %v1405
      %v1422 = vadd.f32 %v1320, %v1410
      %v1423 = vadd.f32 %v1321, %v1413
      %1424 = vst [vmem:[#allocation3] sm:$0xff] %v1416
      %1425 = vst [vmem:[#allocation3 + $0x8] sm:$0xff] %v1417
      %1426 = vst [vmem:[#allocation3 + $0x10] sm:$0xff] %v1418
      %1427 = vst [vmem:[#allocation3 + $0x18] sm:$0xff] %v1419
      %1428 = vst [vmem:[#allocation3 + $0x20] sm:$0xff] %v1420
      %1429 = vst [vmem:[#allocation3 + $0x28] sm:$0xff] %v1421
      %1430 = vst [vmem:[#allocation3 + $0x30] sm:$0xff] %v1422
      %1431 = vst [vmem:[#allocation3 + $0x38] sm:$0xff] %v1423
      %v1432 = vld [vmem:[#allocation3] sm:$0xff]
      %v1433 = vld [vmem:[#allocation3 + $0x8] sm:$0xff]
      %v1434 = vld [vmem:[#allocation3 + $0x10] sm:$0xff]
      %v1435 = vld [vmem:[#allocation3 + $0x18] sm:$0xff]
      %v1436 = vld [vmem:[#allocation3 + $0x20] sm:$0xff]
      %v1437 = vld [vmem:[#allocation3 + $0x28] sm:$0xff]
      %v1438 = vld [vmem:[#allocation3 + $0x30] sm:$0xff]
      %v1439 = vld [vmem:[#allocation3 + $0x38] sm:$0xff]
      %v1440 = vld [vmem:[%s2] sm:$0x1]
      %v1442 = vlaneseq
      %v1443 = vshrl.u32 %v1442, 7
      %v1444 = vsub.s32 0, %v1443
      %v1445 = vrot.slane %v1440, %v1444
      %v1447 = vadd.f32 %v1432, %v1445
      %v1448 = vadd.f32 %v1433, %v1445
      %v1449 = vadd.f32 %v1434, %v1445
      %v1450 = vadd.f32 %v1435, %v1445
      %v1451 = vadd.f32 %v1436, %v1445
      %v1452 = vadd.f32 %v1437, %v1445
      %v1453 = vadd.f32 %v1438, %v1445
      %v1454 = vadd.f32 %v1439, %v1445
      %vm1455 = vcmp.gt.f32.partialorder %v1447, 0.0
      %vm1456 = vcmp.gt.f32.partialorder %v1448, 0.0
      %vm1457 = vcmp.gt.f32.partialorder %v1449, 0.0
      %vm1458 = vcmp.gt.f32.partialorder %v1450, 0.0
      %vm1459 = vcmp.gt.f32.partialorder %v1451, 0.0
      %vm1460 = vcmp.gt.f32.partialorder %v1452, 0.0
      %vm1461 = vcmp.gt.f32.partialorder %v1453, 0.0
      %vm1462 = vcmp.gt.f32.partialorder %v1454, 0.0
      %v1463 = vmul.f32 %v1447, 0.2
      %v1464 = vmul.f32 %v1448, 0.2
      %v1465 = vmul.f32 %v1449, 0.2
      %v1466 = vmul.f32 %v1450, 0.2
      %v1467 = vmul.f32 %v1451, 0.2
      %v1468 = vmul.f32 %v1452, 0.2
      %v1469 = vmul.f32 %v1453, 0.2
      %v1470 = vmul.f32 %v1454, 0.2
      %v1471 = vsel %vm1455, %v1447, %v1463
      %v1472 = vsel %vm1456, %v1448, %v1464
      %v1473 = vsel %vm1457, %v1449, %v1465
      %v1474 = vsel %vm1458, %v1450, %v1466
      %v1475 = vsel %vm1459, %v1451, %v1467
      %v1476 = vsel %vm1460, %v1452, %v1468
      %v1477 = vsel %vm1461, %v1453, %v1469
      %v1478 = vsel %vm1462, %v1454, %v1470
      %1479 = vst [vmem:[%s170] sm:$0xff] %v1471
      %1480 = vst [vmem:[%s170 + $0x8] sm:$0xff] %v1472
      %1481 = vst [vmem:[%s170 + $0x10] sm:$0xff] %v1473
      %1482 = vst [vmem:[%s170 + $0x18] sm:$0xff] %v1474
      %1483 = vst [vmem:[%s170 + $0x20] sm:$0xff] %v1475
      %1484 = vst [vmem:[%s170 + $0x28] sm:$0xff] %v1476
      %1485 = vst [vmem:[%s170 + $0x30] sm:$0xff] %v1477
      %1486 = vst [vmem:[%s170 + $0x38] sm:$0xff] %v1478
      %p1487 = scmp.lt.s32.totalorder %s14, 1
      %s1488 = scalar_select %p1487, %s14, 1
      %s1489 = smul.addr %s1488, 8
      %s1490 = smul.addr %s1489, 8
      %s1491 = scalar_lea.vmem %s3, %s1490
      // Predicated region
      $region33: #{unet_compress_forward.1} parent=31 // pred_check
        %p1492 = pneg %p100
      $region34: #{unet_compress_forward.1} parent=31 // pred_check_branch
        %1494 = sbr.rel (%p1492) target = $region36
      $region35: #{unet_compress_forward.1} parent=31 // pred_region
        _
      $region36: #{unet_compress_forward.1} parent=31 // pred_fallthru
        _
    $region32: #{unet_compress_forward.1} parent=5 // pred_fallthru
      _
    %p1495 = scmp.le.s32.totalorder 2, %s9
    // Predicated region
    $region37: #{unet_compress_forward.1} parent=5 // pred_check
      %p1496 = pneg %p1495
    $region38: #{unet_compress_forward.1} parent=5 // pred_check_branch
      %1498 = sbr.rel (%p1496) target = $region40
    $region39: #{unet_compress_forward.1} parent=5 // pred_region
      %s1499 = ssub.s32 %s9, 2
      // Predicated region
      $region41: #{unet_compress_forward.1} parent=39 // pred_check
        %p1500 = pneg %p106
      $region42: #{unet_compress_forward.1} parent=39 // pred_check_branch
        %1502 = sbr.rel (%p1500) target = $region44
      $region43: #{unet_compress_forward.1} parent=39 // pred_region
        %p1503 = scmp.lt.s32.totalorder %s15, 1
        %s1504 = scalar_select %p1503, %s15, 1
        %s1505 = smul.addr %s1504, 8
        %s1506 = smul.addr %s1505, 8
        %s1507 = scalar_lea.vmem %s3, %s1506
      $region44: #{unet_compress_forward.1} parent=39 // pred_fallthru
        _
    $region40: #{unet_compress_forward.1} parent=5 // pred_fallthru
      _
  $region6: #{unet_compress_forward.1} parent=0 // loop_footer
    %s13 = sadd.s32 1, %s9
  $region7: #{unet_compress_forward.1} parent=0 // loop_footer_branch
    %8 = sbr.rel target = $region3
  $region8: #{unet_compress_forward.1} parent=0 // loop_exit
    _

</llo_original>
